<compile_context>
chip_gen: v5e
topology: v5e:2x2
jax: 0.10.0
libtpu: 0.0.40
codegen_flags: <defaults>
</compile_context>

<pallas_src>
import functools

import numpy as np
import jax
import jax.numpy as jnp
from jax import lax
from jax.experimental import pallas as pl
from jax.experimental.pallas import tpu as pltpu

# ---------------- configuration consistent with DSWNV.__init__ ----------------
N_QUANTIZE = 32          # n_quantize
N_AUX = 8                # n_aux
HID_CHN = 16             # hid_chn
SKIP_CHN = 16            # skip_chn
AUX_KERNEL_SIZE = 3      # aux_kernel_size
AUX_DILATION_SIZE = 2    # aux_dilation_size
DILATION_DEPTH = 2
DILATION_REPEAT = 2
KERNEL_SIZE = 4          # kernel_size of causal convs
UPSAMPLING_FACTOR = 5
BATCH = 2
T_AUX = 5
T = T_AUX * UPSAMPLING_FACTOR - 1        # audio length = 24 (multiple of 8)

REC_FIELD = AUX_KERNEL_SIZE ** AUX_DILATION_SIZE     # 9
IN_AUX_DIM = N_AUX * REC_FIELD                       # 72
DIL_FACTS = tuple([i for i in range((DILATION_DEPTH))] * DILATION_REPEAT)  # (0,1,0,1)
N_LAYERS = len(DIL_FACTS)
LANE_W = 2 * HID_CHN                                 # fused [z|t] lane width == 32
assert LANE_W == N_QUANTIZE                          # head weights share the 32-lane slabs


# ------------------------------- Pallas kernel ---------------------------------------
def dswnv_kernel(x_ref, a_ref, wl_ref, bl_ref, wh_ref, bh_ref, out_ref,
                 *, dil_facts, kernel_size, hid_chn):
    Tt = x_ref.shape[1]
    c_aux = x_ref.shape[2]
    Q = a_ref.shape[2]
    K = kernel_size
    H = hid_chn

    def mm(a, b):
        return jnp.dot(a, b, preferred_element_type=jnp.float32)

    # One hoisted row-index iota; per-shift masks built once and reused
    # (JAX does not CSE broadcast_in_dim, so per-call rebuilds would bloat VALU work).
    row_idx = lax.broadcasted_iota(jnp.int32, (Tt, 1), 0)
    mask_cache = {}

    def shift_right(m, s):
        # m[t] -> m[t - s], zeros for t < s.  Circular XLU roll + zero-mask of the
        # wrapped-around first s rows (replaces the old (T,T) shift-matrix matmul).
        if s == 0:
            return m
        if s not in mask_cache:
            mask_cache[s] = row_idx >= s
        return jnp.where(mask_cache[s], pltpu.roll(m, s, axis=0), 0.0)

    x = x_ref[0]          # (T, IN_AUX_DIM)
    a = a_ref[0]          # (T, Q)  one-hot audio

    # ---- CausalConv1d(n_quantize -> hid_chn, K, dil_fact=0) + softsign
    #      K taps fused: (T, K*Q) @ (K*Q, 2H)  (weight zero-padded on lanes [H:2H])
    acat = jnp.concatenate([shift_right(a, K - 1 - k) for k in range(K)], axis=1)
    hc = mm(acat, wh_ref[0:K * Q, :]) + bh_ref[0:1, :]
    hc = hc[:, :H]
    h = hc * pl.reciprocal(1.0 + jnp.abs(hc), approx=True)     # F.softsign via EUP

    # ---- stack of gated dilated-conv residual layers
    r_ix = c_aux                 # row offsets inside the per-layer weight slab
    r_dw = r_ix + K * H          # (all multiples of 8: 72, 136, 152)
    r_sk = r_dw + H
    sum_out = jnp.zeros((Tt, 2 * H), jnp.float32)   # lanes [H:2H] stay exactly 0
    for l, d in enumerate(dil_facts):
        dil = K ** d
        # in_x 1x1 conv on aux conditioning, z/t halves fused along lanes [z | t]
        fx = mm(x, wl_ref[l, 0:r_ix, :]) + bl_ref[l, 0:1, :]
        # dilated CausalConv1d on h, K taps and z/t halves fused into one matmul
        hcat = jnp.concatenate(
            [shift_right(h, (K - 1 - k) * dil) for k in range(K)], axis=1)
        fh = mm(hcat, wl_ref[l, r_ix:r_dw, :]) + bl_ref[l, 1:2, :]
        g = fx * fh                                   # (T, 2H) = [xz*hz | xt*ht]
        z = jax.nn.sigmoid(g[:, :H])
        h = (1.0 - z) * jnp.tanh(g[:, H:]) + z * h
        # skip 1x1 conv (weights/bias zero-padded to 2H lanes -> upper half stays 0)
        sum_out = sum_out + mm(h, wl_ref[l, r_dw:r_sk, :]) + bl_ref[l, 2:3, :]

    # ---- out_2(relu(out_1(relu(sum_out))))
    r_o1 = K * Q
    r_o2 = r_o1 + 2 * H
    r_end = r_o2 + Q
    o = mm(jnp.maximum(sum_out, 0.0), wh_ref[r_o1:r_o2, :]) + bh_ref[1:2, :]
    o = mm(jnp.maximum(o, 0.0), wh_ref[r_o2:r_end, :]) + bh_ref[2:3, :]
    out_ref[0] = o.astype(out_ref.dtype)


# ------------------------- weight packing (wrapper side) -----------------------------
def pack_weights(p):
    """Fuse z/t halves, stack the K conv taps, and pack everything into 4 lane-dense
    slabs (32 lanes).  All in-slab row offsets are multiples of 8."""
    L, K, H, Q, S = N_LAYERS, KERNEL_SIZE, HID_CHN, N_QUANTIZE, SKIP_CHN
    pad_sk = 2 * H - S

    # per-layer weights: rows = [ in_x (72) | dil taps (K*H=64) | skip (16, lane-padded) ]
    ixw = jnp.concatenate([p['ixwz'], p['ixwt']], axis=-1)                   # (L,72,2H)
    dw = jnp.concatenate([p['dwz'], p['dwt']], axis=-1).reshape(L, K * H, 2 * H)
    skw = jnp.pad(p['skw'], ((0, 0), (0, 0), (0, pad_sk)))                   # (L,16,2H)
    w_layers = jnp.concatenate([ixw, dw, skw], axis=1)                       # (L,152,2H)

    ixb = jnp.concatenate([p['ixbz'], p['ixbt']], axis=-1)                   # (L,1,2H)
    db = jnp.concatenate([p['dbz'], p['dbt']], axis=-1)                      # (L,1,2H)
    skb = jnp.pad(p['skb'], ((0, 0), (0, 0), (0, pad_sk)))                   # (L,1,2H)
    b_layers = jnp.concatenate([ixb, db, skb], axis=1)                       # (L,3,2H)

    # head weights: rows = [ causal conv taps (K*Q=128, lane-padded) | out_1 (row-padded
    #                        to 2H=32) | out_2 (Q=32) ]
    cw = jnp.pad(p['cw'].reshape(K * Q, H), ((0, 0), (0, 2 * H - H)))        # (128,2H)
    o1w = jnp.pad(p['o1w'], ((0, 2 * H - S), (0, 0)))                        # (2H,Q)
    w_head = jnp.concatenate([cw, o1w, p['o2w']], axis=0)                    # (192,2H)

    cb = jnp.pad(p['cb'], ((0, 0), (0, 2 * H - H)))                          # (1,2H)
    b_head = jnp.concatenate([cb, p['o1b'], p['o2b']], axis=0)               # (3,2H)
    return w_layers, b_layers, w_head, b_head


def dswnv_pallas(x_btc, audio_btc, packed):
    B, Tt, Cx = x_btc.shape
    Q = audio_btc.shape[2]
    w_layers, b_layers, w_head, b_head = packed

    def full_spec(w):
        return pl.BlockSpec(w.shape, lambda b, n=w.ndim: (0,) * n)

    in_specs = [pl.BlockSpec((1, Tt, Cx), lambda b: (b, 0, 0)),
                pl.BlockSpec((1, Tt, Q), lambda b: (b, 0, 0)),
                full_spec(w_layers), full_spec(b_layers),
                full_spec(w_head), full_spec(b_head)]
    out_spec = pl.BlockSpec((1, Tt, Q), lambda b: (b, 0, 0))

    kernel = functools.partial(dswnv_kernel, dil_facts=DIL_FACTS,
                               kernel_size=KERNEL_SIZE, hid_chn=HID_CHN)
    return pl.pallas_call(
        kernel,
        out_shape=jax.ShapeDtypeStruct((B, Tt, Q), jnp.float32),
        grid=(B,),
        in_specs=in_specs,
        out_specs=out_spec,
        compiler_params=pltpu.CompilerParams(dimension_semantics=("parallel",)),
    )(x_btc, audio_btc, w_layers, b_layers, w_head, b_head)


# ------------------------- plain-JAX glue (aux preprocessing) -------------------------
def aux_path(aux_bct, p):
    """scale_in -> TwoSidedDilConv1d -> UpSampling -> [:, :, 1:]  (all NCT layout)."""
    k = AUX_KERNEL_SIZE
    y = jnp.einsum('oc,bct->bot', p['scale_w'], aux_bct) + p['scale_b'][None, :, None]
    y = lax.conv_general_dilated(y, p['aux0_w'], window_strides=(1,),
                                 padding=[((k - 1) // 2, (k - 1) // 2)],
                                 rhs_dilation=(1,),
                                 dimension_numbers=('NCH', 'OIH', 'NCH'))
    y = y + p['aux0_b'][None, :, None]
    y = lax.conv_general_dilated(y, p['aux1_w'], window_strides=(1,),
                                 padding=[((k * k - k) // 2, (k * k - k) // 2)],
                                 rhs_dilation=(k,),
                                 dimension_numbers=('NCH', 'OIH', 'NCH'))
    y = y + p['aux1_b'][None, :, None]
    B, C, Ta = y.shape
    U = p['up_w'].shape[0]
    y = (y[:, :, :, None] * p['up_w'][None, None, None, :]).reshape(B, C, Ta * U) + p['up_b']
    return y[:, :, 1:]


# ----------------------- pure-JAX reference of the kernel math ------------------------
def ref_wavenet(x_btc, a_btc, p):
    K = KERNEL_SIZE

    def causal(hh, W, b, dil):
        Tt = hh.shape[1]
        acc = 0.0
        for k in range(K):
            s = (K - 1 - k) * dil
            hs = jnp.pad(hh, ((0, 0), (s, 0), (0, 0)))[:, :Tt]
            acc = acc + jnp.einsum('btc,cd->btd', hs, W[k])
        return acc + b

    hc = causal(a_btc, p['cw'], p['cb'], 1)
    h = hc / (1.0 + jnp.abs(hc))
    sum_out = 0.0
    for l, d in enumerate(DIL_FACTS):
        dil = K ** d
        xz = jnp.einsum('btc,cd->btd', x_btc, p['ixwz'][l]) + p['ixbz'][l]
        xt = jnp.einsum('btc,cd->btd', x_btc, p['ixwt'][l]) + p['ixbt'][l]
        hz = causal(h, p['dwz'][l], p['dbz'][l], dil)
        ht = causal(h, p['dwt'][l], p['dbt'][l], dil)
        z = jax.nn.sigmoid(xz * hz)
        h = (1.0 - z) * jnp.tanh(xt * ht) + z * h
        sum_out = sum_out + jnp.einsum('btc,cd->btd', h, p['skw'][l]) + p['skb'][l]
    o = jnp.einsum('btc,cd->btd', jnp.maximum(sum_out, 0.0), p['o1w']) + p['o1b']
    o = jnp.einsum('btc,cd->btd', jnp.maximum(o, 0.0), p['o2w']) + p['o2b']
    return o


# --------------------------------------- main ----------------------------------------
if __name__ == "__main__":
    key = jax.random.PRNGKey(0)
    keys = jax.random.split(key, 32)
    _ki = iter(keys)

    def nrm(shape, scale=0.1):
        return jax.random.normal(next(_ki), shape, jnp.float32) * scale

    L, K = N_LAYERS, KERNEL_SIZE
    params = dict(
        # aux path
        scale_w=nrm((N_AUX, N_AUX)), scale_b=nrm((N_AUX,)),
        aux0_w=nrm((N_AUX * AUX_KERNEL_SIZE, N_AUX, AUX_KERNEL_SIZE)),
        aux0_b=nrm((N_AUX * AUX_KERNEL_SIZE,)),
        aux1_w=nrm((N_AUX * AUX_KERNEL_SIZE ** 2, N_AUX * AUX_KERNEL_SIZE, AUX_KERNEL_SIZE)),
        aux1_b=nrm((N_AUX * AUX_KERNEL_SIZE ** 2,)),
        up_w=nrm((UPSAMPLING_FACTOR,)), up_b=nrm(()),
        # causal conv (audio -> hid)
        cw=nrm((K, N_QUANTIZE, HID_CHN)), cb=nrm((1, HID_CHN)),
        # per-layer gated conv weights (z / t halves stored separately)
        ixwz=nrm((L, IN_AUX_DIM, HID_CHN)), ixwt=nrm((L, IN_AUX_DIM, HID_CHN)),
        ixbz=nrm((L, 1, HID_CHN)), ixbt=nrm((L, 1, HID_CHN)),
        dwz=nrm((L, K, HID_CHN, HID_CHN)), dwt=nrm((L, K, HID_CHN, HID_CHN)),
        dbz=nrm((L, 1, HID_CHN)), dbt=nrm((L, 1, HID_CHN)),
        skw=nrm((L, HID_CHN, SKIP_CHN)), skb=nrm((L, 1, SKIP_CHN)),
        # output head
        o1w=nrm((SKIP_CHN, N_QUANTIZE)), o1b=nrm((1, N_QUANTIZE)),
        o2w=nrm((N_QUANTIZE, N_QUANTIZE)), o2b=nrm((1, N_QUANTIZE)),
    )

    kin = jax.random.split(jax.random.PRNGKey(1), 2)
    # inputs in PyTorch NCT layout
    aux = jax.random.normal(kin[0], (BATCH, N_AUX, T_AUX), jnp.float32)
    ids = jax.random.randint(kin[1], (BATCH, T), 0, N_QUANTIZE)
    audio = jax.nn.one_hot(ids, N_QUANTIZE, dtype=jnp.float32).transpose(0, 2, 1)

    # preprocessing glue (plain JAX): x = upsampling(conv_aux(scale_in(aux)))[:, :, 1:]
    x_bct = aux_path(aux, params)                      # (B, IN_AUX_DIM, T)
    x_btc = jnp.transpose(x_bct, (0, 2, 1))            # -> (B, T, C) kernel layout
    a_btc = jnp.transpose(audio, (0, 2, 1))            # -> (B, T, n_quantize)

    packed = pack_weights(params)                      # 4 lane-dense weight slabs
    out = dswnv_pallas(x_btc, a_btc, packed)           # (B, T, n_quantize)
    out = jax.block_until_ready(out)
    assert out.shape == (BATCH, T, N_QUANTIZE)

    ref = ref_wavenet(x_btc, a_btc, params)
    np.testing.assert_allclose(np.asarray(out), np.asarray(ref), rtol=2e-2, atol=2e-2)

    print("KERNEL_OK")
</pallas_src>

<mosaic_0001>
module attributes {stable_mosaic.version = 11 : i64} {
  func.func @dswnv_kernel(%arg0: i32, %arg1: memref<1x24x72xf32, #tpu.memory_space<vmem>>, %arg2: memref<1x24x32xf32, #tpu.memory_space<vmem>>, %arg3: memref<4x152x32xf32, #tpu.memory_space<vmem>>, %arg4: memref<4x3x32xf32, #tpu.memory_space<vmem>>, %arg5: memref<192x32xf32, #tpu.memory_space<vmem>>, %arg6: memref<3x32xf32, #tpu.memory_space<vmem>>, %arg7: memref<1x24x32xf32, #tpu.memory_space<vmem>>) attributes {dimension_semantics = [#tpu.dimension_semantics<parallel>], iteration_bounds = array<i64: 2>, scalar_prefetch = 0 : i64, scratch_operands = 0 : i64, tpu.core_type = #tpu.core_type<tc>, window_params = [{transform_indices = @transform_0, window_bounds = array<i64: 1, 24, 72>}, {transform_indices = @transform_1, window_bounds = array<i64: 1, 24, 32>}, {pipeline_mode = #tpu.pipeline_mode<synchronous>, transform_indices = @transform_2, window_bounds = array<i64: 4, 152, 32>}, {pipeline_mode = #tpu.pipeline_mode<synchronous>, transform_indices = @transform_3, window_bounds = array<i64: 4, 3, 32>}, {pipeline_mode = #tpu.pipeline_mode<synchronous>, transform_indices = @transform_4, window_bounds = array<i64: 192, 32>}, {pipeline_mode = #tpu.pipeline_mode<synchronous>, transform_indices = @transform_5, window_bounds = array<i64: 3, 32>}, {transform_indices = @transform_6, window_bounds = array<i64: 1, 24, 32>}]} {
    %0 = tpu.iota {dimensions = array<i32: 0>} : vector<24x1xi32>
    %c0 = arith.constant 0 : index
    %c0_0 = arith.constant 0 : index
    %c0_1 = arith.constant 0 : index
    %1 = vector.load %arg1[%c0, %c0_0, %c0_1] : memref<1x24x72xf32, #tpu.memory_space<vmem>>, vector<1x24x72xf32>
    %2 = vector.shape_cast %1 : vector<1x24x72xf32> to vector<24x72xf32>
    %c0_2 = arith.constant 0 : index
    %c0_3 = arith.constant 0 : index
    %c0_4 = arith.constant 0 : index
    %3 = vector.load %arg2[%c0_2, %c0_3, %c0_4] : memref<1x24x32xf32, #tpu.memory_space<vmem>>, vector<1x24x32xf32>
    %4 = vector.shape_cast %3 : vector<1x24x32xf32> to vector<24x32xf32>
    %c3_i32 = arith.constant 3 : i32
    %5 = vector.broadcast %c3_i32 : i32 to vector<24x1xi32>
    %6 = arith.cmpi sge, %0, %5 : vector<24x1xi32>
    %c3_i32_5 = arith.constant 3 : i32
    %7 = tpu.dynamic_rotate %4 by %c3_i32_5 dim 0 : vector<24x32xf32>, i32 -> vector<24x32xf32>
    %cst = arith.constant 0.000000e+00 : f32
    %8 = vector.shape_cast %6 : vector<24x1xi1> to vector<24x1xi1>
    %9 = vector.broadcast %8 : vector<24x1xi1> to vector<24x32xi1>
    %10 = vector.broadcast %cst : f32 to vector<24x32xf32>
    %11 = arith.select %9, %7, %10 : vector<24x32xi1>, vector<24x32xf32>
    %c2_i32 = arith.constant 2 : i32
    %12 = vector.broadcast %c2_i32 : i32 to vector<24x1xi32>
    %13 = arith.cmpi sge, %0, %12 : vector<24x1xi32>
    %c2_i32_6 = arith.constant 2 : i32
    %14 = tpu.dynamic_rotate %4 by %c2_i32_6 dim 0 : vector<24x32xf32>, i32 -> vector<24x32xf32>
    %cst_7 = arith.constant 0.000000e+00 : f32
    %15 = vector.shape_cast %13 : vector<24x1xi1> to vector<24x1xi1>
    %16 = vector.broadcast %15 : vector<24x1xi1> to vector<24x32xi1>
    %17 = vector.broadcast %cst_7 : f32 to vector<24x32xf32>
    %18 = arith.select %16, %14, %17 : vector<24x32xi1>, vector<24x32xf32>
    %c1_i32 = arith.constant 1 : i32
    %19 = vector.broadcast %c1_i32 : i32 to vector<24x1xi32>
    %20 = arith.cmpi sge, %0, %19 : vector<24x1xi32>
    %c1_i32_8 = arith.constant 1 : i32
    %21 = tpu.dynamic_rotate %4 by %c1_i32_8 dim 0 : vector<24x32xf32>, i32 -> vector<24x32xf32>
    %cst_9 = arith.constant 0.000000e+00 : f32
    %22 = vector.shape_cast %20 : vector<24x1xi1> to vector<24x1xi1>
    %23 = vector.broadcast %22 : vector<24x1xi1> to vector<24x32xi1>
    %24 = vector.broadcast %cst_9 : f32 to vector<24x32xf32>
    %25 = arith.select %23, %21, %24 : vector<24x32xi1>, vector<24x32xf32>
    %26 = tpu.concatenate %11, %18, %25, %4 in 1 : vector<24x32xf32>, vector<24x32xf32>, vector<24x32xf32>, vector<24x32xf32> -> vector<24x128xf32>
    %c0_10 = arith.constant 0 : index
    %c0_11 = arith.constant 0 : index
    %27 = vector.load %arg5[%c0_10, %c0_11] : memref<192x32xf32, #tpu.memory_space<vmem>>, vector<128x32xf32>
    %cst_12 = arith.constant dense<0.000000e+00> : vector<24x32xf32>
    %28 = tpu.matmul %26, %27, %cst_12 {dimension_numbers = #tpu.dot_dimension_numbers<[1], [0], [0], [1], [0, 0, 1, 1], [], []>} : vector<24x128xf32>, vector<128x32xf32>, vector<24x32xf32> -> vector<24x32xf32>
    %c0_13 = arith.constant 0 : index
    %c0_14 = arith.constant 0 : index
    %29 = vector.load %arg6[%c0_13, %c0_14] : memref<3x32xf32, #tpu.memory_space<vmem>>, vector<1x32xf32>
    %30 = vector.broadcast %29 : vector<1x32xf32> to vector<24x32xf32>
    %31 = arith.addf %28, %30 : vector<24x32xf32>
    %32 = vector.extract_strided_slice %31 {offsets = [0, 0], sizes = [24, 16], strides = [1, 1]} : vector<24x32xf32> to vector<24x16xf32>
    %33 = math.absf %32 : vector<24x16xf32>
    %cst_15 = arith.constant 1.000000e+00 : f32
    %34 = vector.broadcast %cst_15 : f32 to vector<24x16xf32>
    %35 = arith.addf %34, %33 : vector<24x16xf32>
    %36 = tpu.reciprocal %35 {approx = true} : vector<24x16xf32> -> vector<24x16xf32>
    %37 = arith.mulf %32, %36 : vector<24x16xf32>
    %cst_16 = arith.constant 0.000000e+00 : f32
    %38 = vector.broadcast %cst_16 : f32 to vector<24x32xf32>
    %c0_17 = arith.constant 0 : index
    %c0_18 = arith.constant 0 : index
    %c0_19 = arith.constant 0 : index
    %39 = vector.load %arg3[%c0_17, %c0_18, %c0_19] : memref<4x152x32xf32, #tpu.memory_space<vmem>>, vector<1x72x32xf32>
    %40 = vector.shape_cast %39 : vector<1x72x32xf32> to vector<72x32xf32>
    %cst_20 = arith.constant dense<0.000000e+00> : vector<24x32xf32>
    %41 = tpu.matmul %2, %40, %cst_20 {dimension_numbers = #tpu.dot_dimension_numbers<[1], [0], [0], [1], [0, 0, 1, 1], [], []>} : vector<24x72xf32>, vector<72x32xf32>, vector<24x32xf32> -> vector<24x32xf32>
    %c0_21 = arith.constant 0 : index
    %c0_22 = arith.constant 0 : index
    %c0_23 = arith.constant 0 : index
    %42 = vector.load %arg4[%c0_21, %c0_22, %c0_23] : memref<4x3x32xf32, #tpu.memory_space<vmem>>, vector<1x1x32xf32>
    %43 = vector.shape_cast %42 : vector<1x1x32xf32> to vector<1x32xf32>
    %44 = vector.broadcast %43 : vector<1x32xf32> to vector<24x32xf32>
    %45 = arith.addf %41, %44 : vector<24x32xf32>
    %c3_i32_24 = arith.constant 3 : i32
    %46 = tpu.dynamic_rotate %37 by %c3_i32_24 dim 0 : vector<24x16xf32>, i32 -> vector<24x16xf32>
    %cst_25 = arith.constant 0.000000e+00 : f32
    %47 = vector.shape_cast %6 : vector<24x1xi1> to vector<24x1xi1>
    %48 = vector.broadcast %47 : vector<24x1xi1> to vector<24x16xi1>
    %49 = vector.broadcast %cst_25 : f32 to vector<24x16xf32>
    %50 = arith.select %48, %46, %49 : vector<24x16xi1>, vector<24x16xf32>
    %c2_i32_26 = arith.constant 2 : i32
    %51 = tpu.dynamic_rotate %37 by %c2_i32_26 dim 0 : vector<24x16xf32>, i32 -> vector<24x16xf32>
    %cst_27 = arith.constant 0.000000e+00 : f32
    %52 = vector.shape_cast %13 : vector<24x1xi1> to vector<24x1xi1>
    %53 = vector.broadcast %52 : vector<24x1xi1> to vector<24x16xi1>
    %54 = vector.broadcast %cst_27 : f32 to vector<24x16xf32>
    %55 = arith.select %53, %51, %54 : vector<24x16xi1>, vector<24x16xf32>
    %c1_i32_28 = arith.constant 1 : i32
    %56 = tpu.dynamic_rotate %37 by %c1_i32_28 dim 0 : vector<24x16xf32>, i32 -> vector<24x16xf32>
    %cst_29 = arith.constant 0.000000e+00 : f32
    %57 = vector.shape_cast %20 : vector<24x1xi1> to vector<24x1xi1>
    %58 = vector.broadcast %57 : vector<24x1xi1> to vector<24x16xi1>
    %59 = vector.broadcast %cst_29 : f32 to vector<24x16xf32>
    %60 = arith.select %58, %56, %59 : vector<24x16xi1>, vector<24x16xf32>
    %61 = tpu.concatenate %50, %55, %60, %37 in 1 : vector<24x16xf32>, vector<24x16xf32>, vector<24x16xf32>, vector<24x16xf32> -> vector<24x64xf32>
    %c0_30 = arith.constant 0 : index
    %c72 = arith.constant 72 : index
    %c0_31 = arith.constant 0 : index
    %62 = vector.load %arg3[%c0_30, %c72, %c0_31] : memref<4x152x32xf32, #tpu.memory_space<vmem>>, vector<1x64x32xf32>
    %63 = vector.shape_cast %62 : vector<1x64x32xf32> to vector<64x32xf32>
    %cst_32 = arith.constant dense<0.000000e+00> : vector<24x32xf32>
    %64 = tpu.matmul %61, %63, %cst_32 {dimension_numbers = #tpu.dot_dimension_numbers<[1], [0], [0], [1], [0, 0, 1, 1], [], []>} : vector<24x64xf32>, vector<64x32xf32>, vector<24x32xf32> -> vector<24x32xf32>
    %c0_33 = arith.constant 0 : index
    %c1 = arith.constant 1 : index
    %c0_34 = arith.constant 0 : index
    %65 = vector.load %arg4[%c0_33, %c1, %c0_34] : memref<4x3x32xf32, #tpu.memory_space<vmem>>, vector<1x1x32xf32>
    %66 = vector.shape_cast %65 : vector<1x1x32xf32> to vector<1x32xf32>
    %67 = vector.broadcast %66 : vector<1x32xf32> to vector<24x32xf32>
    %68 = arith.addf %64, %67 : vector<24x32xf32>
    %69 = arith.mulf %45, %68 : vector<24x32xf32>
    %70 = vector.extract_strided_slice %69 {offsets = [0, 0], sizes = [24, 16], strides = [1, 1]} : vector<24x32xf32> to vector<24x16xf32>
    %71 = arith.negf %70 : vector<24x16xf32>
    %72 = math.exp %71 : vector<24x16xf32>
    %cst_35 = arith.constant 1.000000e+00 : f32
    %73 = vector.broadcast %cst_35 : f32 to vector<24x16xf32>
    %74 = arith.addf %73, %72 : vector<24x16xf32>
    %75 = arith.divf %73, %74 : vector<24x16xf32>
    %cst_36 = arith.constant 1.000000e+00 : f32
    %76 = vector.broadcast %cst_36 : f32 to vector<24x16xf32>
    %77 = arith.subf %76, %75 : vector<24x16xf32>
    %78 = vector.extract_strided_slice %69 {offsets = [0, 16], sizes = [24, 16], strides = [1, 1]} : vector<24x32xf32> to vector<24x16xf32>
    %79 = math.tanh %78 : vector<24x16xf32>
    %80 = arith.mulf %77, %79 : vector<24x16xf32>
    %81 = arith.mulf %75, %37 : vector<24x16xf32>
    %82 = arith.addf %80, %81 : vector<24x16xf32>
    %c0_37 = arith.constant 0 : index
    %c136 = arith.constant 136 : index
    %c0_38 = arith.constant 0 : index
    %83 = vector.load %arg3[%c0_37, %c136, %c0_38] : memref<4x152x32xf32, #tpu.memory_space<vmem>>, vector<1x16x32xf32>
    %84 = vector.shape_cast %83 : vector<1x16x32xf32> to vector<16x32xf32>
    %cst_39 = arith.constant dense<0.000000e+00> : vector<24x32xf32>
    %85 = tpu.matmul %82, %84, %cst_39 {dimension_numbers = #tpu.dot_dimension_numbers<[1], [0], [0], [1], [0, 0, 1, 1], [], []>} : vector<24x16xf32>, vector<16x32xf32>, vector<24x32xf32> -> vector<24x32xf32>
    %86 = arith.addf %38, %85 : vector<24x32xf32>
    %c0_40 = arith.constant 0 : index
    %c2 = arith.constant 2 : index
    %c0_41 = arith.constant 0 : index
    %87 = vector.load %arg4[%c0_40, %c2, %c0_41] : memref<4x3x32xf32, #tpu.memory_space<vmem>>, vector<1x1x32xf32>
    %88 = vector.shape_cast %87 : vector<1x1x32xf32> to vector<1x32xf32>
    %89 = vector.broadcast %88 : vector<1x32xf32> to vector<24x32xf32>
    %90 = arith.addf %86, %89 : vector<24x32xf32>
    %c1_42 = arith.constant 1 : index
    %c0_43 = arith.constant 0 : index
    %c0_44 = arith.constant 0 : index
    %91 = vector.load %arg3[%c1_42, %c0_43, %c0_44] : memref<4x152x32xf32, #tpu.memory_space<vmem>>, vector<1x72x32xf32>
    %92 = vector.shape_cast %91 : vector<1x72x32xf32> to vector<72x32xf32>
    %cst_45 = arith.constant dense<0.000000e+00> : vector<24x32xf32>
    %93 = tpu.matmul %2, %92, %cst_45 {dimension_numbers = #tpu.dot_dimension_numbers<[1], [0], [0], [1], [0, 0, 1, 1], [], []>} : vector<24x72xf32>, vector<72x32xf32>, vector<24x32xf32> -> vector<24x32xf32>
    %c1_46 = arith.constant 1 : index
    %c0_47 = arith.constant 0 : index
    %c0_48 = arith.constant 0 : index
    %94 = vector.load %arg4[%c1_46, %c0_47, %c0_48] : memref<4x3x32xf32, #tpu.memory_space<vmem>>, vector<1x1x32xf32>
    %95 = vector.shape_cast %94 : vector<1x1x32xf32> to vector<1x32xf32>
    %96 = vector.broadcast %95 : vector<1x32xf32> to vector<24x32xf32>
    %97 = arith.addf %93, %96 : vector<24x32xf32>
    %c12_i32 = arith.constant 12 : i32
    %98 = vector.broadcast %c12_i32 : i32 to vector<24x1xi32>
    %99 = arith.cmpi sge, %0, %98 : vector<24x1xi32>
    %c12_i32_49 = arith.constant 12 : i32
    %100 = tpu.dynamic_rotate %82 by %c12_i32_49 dim 0 : vector<24x16xf32>, i32 -> vector<24x16xf32>
    %cst_50 = arith.constant 0.000000e+00 : f32
    %101 = vector.shape_cast %99 : vector<24x1xi1> to vector<24x1xi1>
    %102 = vector.broadcast %101 : vector<24x1xi1> to vector<24x16xi1>
    %103 = vector.broadcast %cst_50 : f32 to vector<24x16xf32>
    %104 = arith.select %102, %100, %103 : vector<24x16xi1>, vector<24x16xf32>
    %c8_i32 = arith.constant 8 : i32
    %105 = vector.broadcast %c8_i32 : i32 to vector<24x1xi32>
    %106 = arith.cmpi sge, %0, %105 : vector<24x1xi32>
    %c8_i32_51 = arith.constant 8 : i32
    %107 = tpu.dynamic_rotate %82 by %c8_i32_51 dim 0 : vector<24x16xf32>, i32 -> vector<24x16xf32>
    %cst_52 = arith.constant 0.000000e+00 : f32
    %108 = vector.shape_cast %106 : vector<24x1xi1> to vector<24x1xi1>
    %109 = vector.broadcast %108 : vector<24x1xi1> to vector<24x16xi1>
    %110 = vector.broadcast %cst_52 : f32 to vector<24x16xf32>
    %111 = arith.select %109, %107, %110 : vector<24x16xi1>, vector<24x16xf32>
    %c4_i32 = arith.constant 4 : i32
    %112 = vector.broadcast %c4_i32 : i32 to vector<24x1xi32>
    %113 = arith.cmpi sge, %0, %112 : vector<24x1xi32>
    %c4_i32_53 = arith.constant 4 : i32
    %114 = tpu.dynamic_rotate %82 by %c4_i32_53 dim 0 : vector<24x16xf32>, i32 -> vector<24x16xf32>
    %cst_54 = arith.constant 0.000000e+00 : f32
    %115 = vector.shape_cast %113 : vector<24x1xi1> to vector<24x1xi1>
    %116 = vector.broadcast %115 : vector<24x1xi1> to vector<24x16xi1>
    %117 = vector.broadcast %cst_54 : f32 to vector<24x16xf32>
    %118 = arith.select %116, %114, %117 : vector<24x16xi1>, vector<24x16xf32>
    %119 = tpu.concatenate %104, %111, %118, %82 in 1 : vector<24x16xf32>, vector<24x16xf32>, vector<24x16xf32>, vector<24x16xf32> -> vector<24x64xf32>
    %c1_55 = arith.constant 1 : index
    %c72_56 = arith.constant 72 : index
    %c0_57 = arith.constant 0 : index
    %120 = vector.load %arg3[%c1_55, %c72_56, %c0_57] : memref<4x152x32xf32, #tpu.memory_space<vmem>>, vector<1x64x32xf32>
    %121 = vector.shape_cast %120 : vector<1x64x32xf32> to vector<64x32xf32>
    %cst_58 = arith.constant dense<0.000000e+00> : vector<24x32xf32>
    %122 = tpu.matmul %119, %121, %cst_58 {dimension_numbers = #tpu.dot_dimension_numbers<[1], [0], [0], [1], [0, 0, 1, 1], [], []>} : vector<24x64xf32>, vector<64x32xf32>, vector<24x32xf32> -> vector<24x32xf32>
    %c1_59 = arith.constant 1 : index
    %c1_60 = arith.constant 1 : index
    %c0_61 = arith.constant 0 : index
    %123 = vector.load %arg4[%c1_59, %c1_60, %c0_61] : memref<4x3x32xf32, #tpu.memory_space<vmem>>, vector<1x1x32xf32>
    %124 = vector.shape_cast %123 : vector<1x1x32xf32> to vector<1x32xf32>
    %125 = vector.broadcast %124 : vector<1x32xf32> to vector<24x32xf32>
    %126 = arith.addf %122, %125 : vector<24x32xf32>
    %127 = arith.mulf %97, %126 : vector<24x32xf32>
    %128 = vector.extract_strided_slice %127 {offsets = [0, 0], sizes = [24, 16], strides = [1, 1]} : vector<24x32xf32> to vector<24x16xf32>
    %129 = arith.negf %128 : vector<24x16xf32>
    %130 = math.exp %129 : vector<24x16xf32>
    %cst_62 = arith.constant 1.000000e+00 : f32
    %131 = vector.broadcast %cst_62 : f32 to vector<24x16xf32>
    %132 = arith.addf %131, %130 : vector<24x16xf32>
    %133 = arith.divf %131, %132 : vector<24x16xf32>
    %cst_63 = arith.constant 1.000000e+00 : f32
    %134 = vector.broadcast %cst_63 : f32 to vector<24x16xf32>
    %135 = arith.subf %134, %133 : vector<24x16xf32>
    %136 = vector.extract_strided_slice %127 {offsets = [0, 16], sizes = [24, 16], strides = [1, 1]} : vector<24x32xf32> to vector<24x16xf32>
    %137 = math.tanh %136 : vector<24x16xf32>
    %138 = arith.mulf %135, %137 : vector<24x16xf32>
    %139 = arith.mulf %133, %82 : vector<24x16xf32>
    %140 = arith.addf %138, %139 : vector<24x16xf32>
    %c1_64 = arith.constant 1 : index
    %c136_65 = arith.constant 136 : index
    %c0_66 = arith.constant 0 : index
    %141 = vector.load %arg3[%c1_64, %c136_65, %c0_66] : memref<4x152x32xf32, #tpu.memory_space<vmem>>, vector<1x16x32xf32>
    %142 = vector.shape_cast %141 : vector<1x16x32xf32> to vector<16x32xf32>
    %cst_67 = arith.constant dense<0.000000e+00> : vector<24x32xf32>
    %143 = tpu.matmul %140, %142, %cst_67 {dimension_numbers = #tpu.dot_dimension_numbers<[1], [0], [0], [1], [0, 0, 1, 1], [], []>} : vector<24x16xf32>, vector<16x32xf32>, vector<24x32xf32> -> vector<24x32xf32>
    %144 = arith.addf %90, %143 : vector<24x32xf32>
    %c1_68 = arith.constant 1 : index
    %c2_69 = arith.constant 2 : index
    %c0_70 = arith.constant 0 : index
    %145 = vector.load %arg4[%c1_68, %c2_69, %c0_70] : memref<4x3x32xf32, #tpu.memory_space<vmem>>, vector<1x1x32xf32>
    %146 = vector.shape_cast %145 : vector<1x1x32xf32> to vector<1x32xf32>
    %147 = vector.broadcast %146 : vector<1x32xf32> to vector<24x32xf32>
    %148 = arith.addf %144, %147 : vector<24x32xf32>
    %c2_71 = arith.constant 2 : index
    %c0_72 = arith.constant 0 : index
    %c0_73 = arith.constant 0 : index
    %149 = vector.load %arg3[%c2_71, %c0_72, %c0_73] : memref<4x152x32xf32, #tpu.memory_space<vmem>>, vector<1x72x32xf32>
    %150 = vector.shape_cast %149 : vector<1x72x32xf32> to vector<72x32xf32>
    %cst_74 = arith.constant dense<0.000000e+00> : vector<24x32xf32>
    %151 = tpu.matmul %2, %150, %cst_74 {dimension_numbers = #tpu.dot_dimension_numbers<[1], [0], [0], [1], [0, 0, 1, 1], [], []>} : vector<24x72xf32>, vector<72x32xf32>, vector<24x32xf32> -> vector<24x32xf32>
    %c2_75 = arith.constant 2 : index
    %c0_76 = arith.constant 0 : index
    %c0_77 = arith.constant 0 : index
    %152 = vector.load %arg4[%c2_75, %c0_76, %c0_77] : memref<4x3x32xf32, #tpu.memory_space<vmem>>, vector<1x1x32xf32>
    %153 = vector.shape_cast %152 : vector<1x1x32xf32> to vector<1x32xf32>
    %154 = vector.broadcast %153 : vector<1x32xf32> to vector<24x32xf32>
    %155 = arith.addf %151, %154 : vector<24x32xf32>
    %c3_i32_78 = arith.constant 3 : i32
    %156 = tpu.dynamic_rotate %140 by %c3_i32_78 dim 0 : vector<24x16xf32>, i32 -> vector<24x16xf32>
    %cst_79 = arith.constant 0.000000e+00 : f32
    %157 = vector.shape_cast %6 : vector<24x1xi1> to vector<24x1xi1>
    %158 = vector.broadcast %157 : vector<24x1xi1> to vector<24x16xi1>
    %159 = vector.broadcast %cst_79 : f32 to vector<24x16xf32>
    %160 = arith.select %158, %156, %159 : vector<24x16xi1>, vector<24x16xf32>
    %c2_i32_80 = arith.constant 2 : i32
    %161 = tpu.dynamic_rotate %140 by %c2_i32_80 dim 0 : vector<24x16xf32>, i32 -> vector<24x16xf32>
    %cst_81 = arith.constant 0.000000e+00 : f32
    %162 = vector.shape_cast %13 : vector<24x1xi1> to vector<24x1xi1>
    %163 = vector.broadcast %162 : vector<24x1xi1> to vector<24x16xi1>
    %164 = vector.broadcast %cst_81 : f32 to vector<24x16xf32>
    %165 = arith.select %163, %161, %164 : vector<24x16xi1>, vector<24x16xf32>
    %c1_i32_82 = arith.constant 1 : i32
    %166 = tpu.dynamic_rotate %140 by %c1_i32_82 dim 0 : vector<24x16xf32>, i32 -> vector<24x16xf32>
    %cst_83 = arith.constant 0.000000e+00 : f32
    %167 = vector.shape_cast %20 : vector<24x1xi1> to vector<24x1xi1>
    %168 = vector.broadcast %167 : vector<24x1xi1> to vector<24x16xi1>
    %169 = vector.broadcast %cst_83 : f32 to vector<24x16xf32>
    %170 = arith.select %168, %166, %169 : vector<24x16xi1>, vector<24x16xf32>
    %171 = tpu.concatenate %160, %165, %170, %140 in 1 : vector<24x16xf32>, vector<24x16xf32>, vector<24x16xf32>, vector<24x16xf32> -> vector<24x64xf32>
    %c2_84 = arith.constant 2 : index
    %c72_85 = arith.constant 72 : index
    %c0_86 = arith.constant 0 : index
    %172 = vector.load %arg3[%c2_84, %c72_85, %c0_86] : memref<4x152x32xf32, #tpu.memory_space<vmem>>, vector<1x64x32xf32>
    %173 = vector.shape_cast %172 : vector<1x64x32xf32> to vector<64x32xf32>
    %cst_87 = arith.constant dense<0.000000e+00> : vector<24x32xf32>
    %174 = tpu.matmul %171, %173, %cst_87 {dimension_numbers = #tpu.dot_dimension_numbers<[1], [0], [0], [1], [0, 0, 1, 1], [], []>} : vector<24x64xf32>, vector<64x32xf32>, vector<24x32xf32> -> vector<24x32xf32>
    %c2_88 = arith.constant 2 : index
    %c1_89 = arith.constant 1 : index
    %c0_90 = arith.constant 0 : index
    %175 = vector.load %arg4[%c2_88, %c1_89, %c0_90] : memref<4x3x32xf32, #tpu.memory_space<vmem>>, vector<1x1x32xf32>
    %176 = vector.shape_cast %175 : vector<1x1x32xf32> to vector<1x32xf32>
    %177 = vector.broadcast %176 : vector<1x32xf32> to vector<24x32xf32>
    %178 = arith.addf %174, %177 : vector<24x32xf32>
    %179 = arith.mulf %155, %178 : vector<24x32xf32>
    %180 = vector.extract_strided_slice %179 {offsets = [0, 0], sizes = [24, 16], strides = [1, 1]} : vector<24x32xf32> to vector<24x16xf32>
    %181 = arith.negf %180 : vector<24x16xf32>
    %182 = math.exp %181 : vector<24x16xf32>
    %cst_91 = arith.constant 1.000000e+00 : f32
    %183 = vector.broadcast %cst_91 : f32 to vector<24x16xf32>
    %184 = arith.addf %183, %182 : vector<24x16xf32>
    %185 = arith.divf %183, %184 : vector<24x16xf32>
    %cst_92 = arith.constant 1.000000e+00 : f32
    %186 = vector.broadcast %cst_92 : f32 to vector<24x16xf32>
    %187 = arith.subf %186, %185 : vector<24x16xf32>
    %188 = vector.extract_strided_slice %179 {offsets = [0, 16], sizes = [24, 16], strides = [1, 1]} : vector<24x32xf32> to vector<24x16xf32>
    %189 = math.tanh %188 : vector<24x16xf32>
    %190 = arith.mulf %187, %189 : vector<24x16xf32>
    %191 = arith.mulf %185, %140 : vector<24x16xf32>
    %192 = arith.addf %190, %191 : vector<24x16xf32>
    %c2_93 = arith.constant 2 : index
    %c136_94 = arith.constant 136 : index
    %c0_95 = arith.constant 0 : index
    %193 = vector.load %arg3[%c2_93, %c136_94, %c0_95] : memref<4x152x32xf32, #tpu.memory_space<vmem>>, vector<1x16x32xf32>
    %194 = vector.shape_cast %193 : vector<1x16x32xf32> to vector<16x32xf32>
    %cst_96 = arith.constant dense<0.000000e+00> : vector<24x32xf32>
    %195 = tpu.matmul %192, %194, %cst_96 {dimension_numbers = #tpu.dot_dimension_numbers<[1], [0], [0], [1], [0, 0, 1, 1], [], []>} : vector<24x16xf32>, vector<16x32xf32>, vector<24x32xf32> -> vector<24x32xf32>
    %196 = arith.addf %148, %195 : vector<24x32xf32>
    %c2_97 = arith.constant 2 : index
    %c2_98 = arith.constant 2 : index
    %c0_99 = arith.constant 0 : index
    %197 = vector.load %arg4[%c2_97, %c2_98, %c0_99] : memref<4x3x32xf32, #tpu.memory_space<vmem>>, vector<1x1x32xf32>
    %198 = vector.shape_cast %197 : vector<1x1x32xf32> to vector<1x32xf32>
    %199 = vector.broadcast %198 : vector<1x32xf32> to vector<24x32xf32>
    %200 = arith.addf %196, %199 : vector<24x32xf32>
    %c3 = arith.constant 3 : index
    %c0_100 = arith.constant 0 : index
    %c0_101 = arith.constant 0 : index
    %201 = vector.load %arg3[%c3, %c0_100, %c0_101] : memref<4x152x32xf32, #tpu.memory_space<vmem>>, vector<1x72x32xf32>
    %202 = vector.shape_cast %201 : vector<1x72x32xf32> to vector<72x32xf32>
    %cst_102 = arith.constant dense<0.000000e+00> : vector<24x32xf32>
    %203 = tpu.matmul %2, %202, %cst_102 {dimension_numbers = #tpu.dot_dimension_numbers<[1], [0], [0], [1], [0, 0, 1, 1], [], []>} : vector<24x72xf32>, vector<72x32xf32>, vector<24x32xf32> -> vector<24x32xf32>
    %c3_103 = arith.constant 3 : index
    %c0_104 = arith.constant 0 : index
    %c0_105 = arith.constant 0 : index
    %204 = vector.load %arg4[%c3_103, %c0_104, %c0_105] : memref<4x3x32xf32, #tpu.memory_space<vmem>>, vector<1x1x32xf32>
    %205 = vector.shape_cast %204 : vector<1x1x32xf32> to vector<1x32xf32>
    %206 = vector.broadcast %205 : vector<1x32xf32> to vector<24x32xf32>
    %207 = arith.addf %203, %206 : vector<24x32xf32>
    %c12_i32_106 = arith.constant 12 : i32
    %208 = tpu.dynamic_rotate %192 by %c12_i32_106 dim 0 : vector<24x16xf32>, i32 -> vector<24x16xf32>
    %cst_107 = arith.constant 0.000000e+00 : f32
    %209 = vector.shape_cast %99 : vector<24x1xi1> to vector<24x1xi1>
    %210 = vector.broadcast %209 : vector<24x1xi1> to vector<24x16xi1>
    %211 = vector.broadcast %cst_107 : f32 to vector<24x16xf32>
    %212 = arith.select %210, %208, %211 : vector<24x16xi1>, vector<24x16xf32>
    %c8_i32_108 = arith.constant 8 : i32
    %213 = tpu.dynamic_rotate %192 by %c8_i32_108 dim 0 : vector<24x16xf32>, i32 -> vector<24x16xf32>
    %cst_109 = arith.constant 0.000000e+00 : f32
    %214 = vector.shape_cast %106 : vector<24x1xi1> to vector<24x1xi1>
    %215 = vector.broadcast %214 : vector<24x1xi1> to vector<24x16xi1>
    %216 = vector.broadcast %cst_109 : f32 to vector<24x16xf32>
    %217 = arith.select %215, %213, %216 : vector<24x16xi1>, vector<24x16xf32>
    %c4_i32_110 = arith.constant 4 : i32
    %218 = tpu.dynamic_rotate %192 by %c4_i32_110 dim 0 : vector<24x16xf32>, i32 -> vector<24x16xf32>
    %cst_111 = arith.constant 0.000000e+00 : f32
    %219 = vector.shape_cast %113 : vector<24x1xi1> to vector<24x1xi1>
    %220 = vector.broadcast %219 : vector<24x1xi1> to vector<24x16xi1>
    %221 = vector.broadcast %cst_111 : f32 to vector<24x16xf32>
    %222 = arith.select %220, %218, %221 : vector<24x16xi1>, vector<24x16xf32>
    %223 = tpu.concatenate %212, %217, %222, %192 in 1 : vector<24x16xf32>, vector<24x16xf32>, vector<24x16xf32>, vector<24x16xf32> -> vector<24x64xf32>
    %c3_112 = arith.constant 3 : index
    %c72_113 = arith.constant 72 : index
    %c0_114 = arith.constant 0 : index
    %224 = vector.load %arg3[%c3_112, %c72_113, %c0_114] : memref<4x152x32xf32, #tpu.memory_space<vmem>>, vector<1x64x32xf32>
    %225 = vector.shape_cast %224 : vector<1x64x32xf32> to vector<64x32xf32>
    %cst_115 = arith.constant dense<0.000000e+00> : vector<24x32xf32>
    %226 = tpu.matmul %223, %225, %cst_115 {dimension_numbers = #tpu.dot_dimension_numbers<[1], [0], [0], [1], [0, 0, 1, 1], [], []>} : vector<24x64xf32>, vector<64x32xf32>, vector<24x32xf32> -> vector<24x32xf32>
    %c3_116 = arith.constant 3 : index
    %c1_117 = arith.constant 1 : index
    %c0_118 = arith.constant 0 : index
    %227 = vector.load %arg4[%c3_116, %c1_117, %c0_118] : memref<4x3x32xf32, #tpu.memory_space<vmem>>, vector<1x1x32xf32>
    %228 = vector.shape_cast %227 : vector<1x1x32xf32> to vector<1x32xf32>
    %229 = vector.broadcast %228 : vector<1x32xf32> to vector<24x32xf32>
    %230 = arith.addf %226, %229 : vector<24x32xf32>
    %231 = arith.mulf %207, %230 : vector<24x32xf32>
    %232 = vector.extract_strided_slice %231 {offsets = [0, 0], sizes = [24, 16], strides = [1, 1]} : vector<24x32xf32> to vector<24x16xf32>
    %233 = arith.negf %232 : vector<24x16xf32>
    %234 = math.exp %233 : vector<24x16xf32>
    %cst_119 = arith.constant 1.000000e+00 : f32
    %235 = vector.broadcast %cst_119 : f32 to vector<24x16xf32>
    %236 = arith.addf %235, %234 : vector<24x16xf32>
    %237 = arith.divf %235, %236 : vector<24x16xf32>
    %cst_120 = arith.constant 1.000000e+00 : f32
    %238 = vector.broadcast %cst_120 : f32 to vector<24x16xf32>
    %239 = arith.subf %238, %237 : vector<24x16xf32>
    %240 = vector.extract_strided_slice %231 {offsets = [0, 16], sizes = [24, 16], strides = [1, 1]} : vector<24x32xf32> to vector<24x16xf32>
    %241 = math.tanh %240 : vector<24x16xf32>
    %242 = arith.mulf %239, %241 : vector<24x16xf32>
    %243 = arith.mulf %237, %192 : vector<24x16xf32>
    %244 = arith.addf %242, %243 : vector<24x16xf32>
    %c3_121 = arith.constant 3 : index
    %c136_122 = arith.constant 136 : index
    %c0_123 = arith.constant 0 : index
    %245 = vector.load %arg3[%c3_121, %c136_122, %c0_123] : memref<4x152x32xf32, #tpu.memory_space<vmem>>, vector<1x16x32xf32>
    %246 = vector.shape_cast %245 : vector<1x16x32xf32> to vector<16x32xf32>
    %cst_124 = arith.constant dense<0.000000e+00> : vector<24x32xf32>
    %247 = tpu.matmul %244, %246, %cst_124 {dimension_numbers = #tpu.dot_dimension_numbers<[1], [0], [0], [1], [0, 0, 1, 1], [], []>} : vector<24x16xf32>, vector<16x32xf32>, vector<24x32xf32> -> vector<24x32xf32>
    %248 = arith.addf %200, %247 : vector<24x32xf32>
    %c3_125 = arith.constant 3 : index
    %c2_126 = arith.constant 2 : index
    %c0_127 = arith.constant 0 : index
    %249 = vector.load %arg4[%c3_125, %c2_126, %c0_127] : memref<4x3x32xf32, #tpu.memory_space<vmem>>, vector<1x1x32xf32>
    %250 = vector.shape_cast %249 : vector<1x1x32xf32> to vector<1x32xf32>
    %251 = vector.broadcast %250 : vector<1x32xf32> to vector<24x32xf32>
    %252 = arith.addf %248, %251 : vector<24x32xf32>
    %cst_128 = arith.constant 0.000000e+00 : f32
    %253 = vector.broadcast %cst_128 : f32 to vector<24x32xf32>
    %254 = arith.maximumf %252, %253 : vector<24x32xf32>
    %c128 = arith.constant 128 : index
    %c0_129 = arith.constant 0 : index
    %255 = vector.load %arg5[%c128, %c0_129] : memref<192x32xf32, #tpu.memory_space<vmem>>, vector<32x32xf32>
    %cst_130 = arith.constant dense<0.000000e+00> : vector<24x32xf32>
    %256 = tpu.matmul %254, %255, %cst_130 {dimension_numbers = #tpu.dot_dimension_numbers<[1], [0], [0], [1], [0, 0, 1, 1], [], []>} : vector<24x32xf32>, vector<32x32xf32>, vector<24x32xf32> -> vector<24x32xf32>
    %c1_131 = arith.constant 1 : index
    %c0_132 = arith.constant 0 : index
    %257 = vector.load %arg6[%c1_131, %c0_132] : memref<3x32xf32, #tpu.memory_space<vmem>>, vector<1x32xf32>
    %258 = vector.broadcast %257 : vector<1x32xf32> to vector<24x32xf32>
    %259 = arith.addf %256, %258 : vector<24x32xf32>
    %cst_133 = arith.constant 0.000000e+00 : f32
    %260 = vector.broadcast %cst_133 : f32 to vector<24x32xf32>
    %261 = arith.maximumf %259, %260 : vector<24x32xf32>
    %c160 = arith.constant 160 : index
    %c0_134 = arith.constant 0 : index
    %262 = vector.load %arg5[%c160, %c0_134] : memref<192x32xf32, #tpu.memory_space<vmem>>, vector<32x32xf32>
    %cst_135 = arith.constant dense<0.000000e+00> : vector<24x32xf32>
    %263 = tpu.matmul %261, %262, %cst_135 {dimension_numbers = #tpu.dot_dimension_numbers<[1], [0], [0], [1], [0, 0, 1, 1], [], []>} : vector<24x32xf32>, vector<32x32xf32>, vector<24x32xf32> -> vector<24x32xf32>
    %c2_136 = arith.constant 2 : index
    %c0_137 = arith.constant 0 : index
    %264 = vector.load %arg6[%c2_136, %c0_137] : memref<3x32xf32, #tpu.memory_space<vmem>>, vector<1x32xf32>
    %265 = vector.broadcast %264 : vector<1x32xf32> to vector<24x32xf32>
    %266 = arith.addf %263, %265 : vector<24x32xf32>
    %c0_138 = arith.constant 0 : index
    %c0_139 = arith.constant 0 : index
    %c0_140 = arith.constant 0 : index
    %267 = vector.load %arg7[%c0_138, %c0_139, %c0_140] : memref<1x24x32xf32, #tpu.memory_space<vmem>>, vector<1x24x32xf32>
    %268 = vector.shape_cast %267 : vector<1x24x32xf32> to vector<24x32xf32>
    %269 = vector.shape_cast %266 : vector<24x32xf32> to vector<1x24x32xf32>
    tpu.vector_store %arg7[%c0_138, %c0_139, %c0_140], %269 {strides = array<i32>} : memref<1x24x32xf32, #tpu.memory_space<vmem>>, vector<1x24x32xf32>,
    return
  }
  func.func @transform_0(%arg0: i32) -> (i32, i32, i32) {
    %c0_i32 = arith.constant 0 : i32
    %c0_i32_0 = arith.constant 0 : i32
    %c0_i32_1 = arith.constant 0 : i32
    return %arg0, %c0_i32, %c0_i32_0 : i32, i32, i32
  }
  func.func @transform_1(%arg0: i32) -> (i32, i32, i32) {
    %c0_i32 = arith.constant 0 : i32
    %c0_i32_0 = arith.constant 0 : i32
    %c0_i32_1 = arith.constant 0 : i32
    return %arg0, %c0_i32, %c0_i32_0 : i32, i32, i32
  }
  func.func @transform_2(%arg0: i32) -> (i32, i32, i32) {
    %c0_i32 = arith.constant 0 : i32
    %c0_i32_0 = arith.constant 0 : i32
    %c0_i32_1 = arith.constant 0 : i32
    %c0_i32_2 = arith.constant 0 : i32
    return %c0_i32, %c0_i32_0, %c0_i32_1 : i32, i32, i32
  }
  func.func @transform_3(%arg0: i32) -> (i32, i32, i32) {
    %c0_i32 = arith.constant 0 : i32
    %c0_i32_0 = arith.constant 0 : i32
    %c0_i32_1 = arith.constant 0 : i32
    %c0_i32_2 = arith.constant 0 : i32
    return %c0_i32, %c0_i32_0, %c0_i32_1 : i32, i32, i32
  }
  func.func @transform_4(%arg0: i32) -> (i32, i32) {
    %c0_i32 = arith.constant 0 : i32
    %c0_i32_0 = arith.constant 0 : i32
    %c0_i32_1 = arith.constant 0 : i32
    return %c0_i32, %c0_i32_0 : i32, i32
  }
  func.func @transform_5(%arg0: i32) -> (i32, i32) {
    %c0_i32 = arith.constant 0 : i32
    %c0_i32_0 = arith.constant 0 : i32
    %c0_i32_1 = arith.constant 0 : i32
    return %c0_i32, %c0_i32_0 : i32, i32
  }
  func.func @transform_6(%arg0: i32) -> (i32, i32, i32) {
    %c0_i32 = arith.constant 0 : i32
    %c0_i32_0 = arith.constant 0 : i32
    %c0_i32_1 = arith.constant 0 : i32
    return %arg0, %c0_i32, %c0_i32_0 : i32, i32, i32
  }
}

</mosaic_0001>

<llo_original>
// kernel: tpu_custom_call.1
$region0: #{tpu_custom_call.1}
  #allocation0 [shape = 'u32[]', space=smem, size = 0x4, offset = 0x4, fixed_abs, tag = 'smem constant byte address 0x4 - core index']
  #allocation1 [shape = 'u32[72,128]{1,0:T(1,128)}', space=vmem, size = 0x9000, scoped, tag = 'internal scratch']
  %s0 = inlined_call_operand.vmem [shape: f32[2,24,72], index: 0, kind: input, shape index: {}]
  %s1 = inlined_call_operand.vmem [shape: f32[2,24,32], index: 1, kind: input, shape index: {}]
  %s2 = inlined_call_operand.vmem [shape: f32[4,152,32], index: 2, kind: input, shape index: {}]
  %s3 = inlined_call_operand.vmem [shape: f32[4,3,32], index: 3, kind: input, shape index: {}]
  %s4 = inlined_call_operand.vmem [shape: f32[192,32], index: 4, kind: input, shape index: {}]
  %s5 = inlined_call_operand.vmem [shape: f32[3,32], index: 5, kind: input, shape index: {}]
  %s6 = inlined_call_operand.hbm [shape: f32[2,24,32], index: 6, kind: output, shape index: {}]
  %s7 = sld [smem:[#allocation0]]
  $region57: #{tpu_custom_call.1} parent=0
    _
  %s9 = ssub.s32 1, %s7
  %s10 = scalar_select 0, %s9, %s7
  $region1: #{tpu_custom_call.1} parent=0
    #allocation2 [shape = 'u8[24576]{0}', space=vmem, size = 0x6000, scoped, tag = 'output window, operand 0']
    #allocation3 [shape = 's32[2]{0}', space=sflag, size = 0x8, scoped, tag = 'scoped memory for tpu_custom_call.1']
    %11 = vsyncpa [#allocation3], 0
    %s12 = scalar_lea.sflag [#allocation3], 1
    %13 = vsyncpa %s12, 0
    loop: start=0, step=1, limit=4
    $region2: #{tpu_custom_call.1} parent=1 // loop_pre_header
      _
    $region3: #{tpu_custom_call.1} parent=1 // loop_header
      %s15 = sphi 0, %s19
      %p16 = scmp.ge.s32.totalorder %s15, 4
      %s25 = sphi 0, %s27
      %s28 = sphi 0, %s25
      %s29 = sphi 0, %s28
      %s45 = sphi 0, %s29
      %s51 = sphi 0, %s53
      %s54 = sphi 0, %s51
      %s55 = sphi 0, %s54
      %s71 = sphi 0, %s55
      %s75 = sphi 0, %s75
      %s77 = sphi 0, %s75
      %s78 = sphi 0, %s77
      %s92 = sphi 0, %s78
      %s96 = sphi 0, %s96
      %s98 = sphi 0, %s96
      %s99 = sphi 0, %s98
      %s113 = sphi 0, %s99
      %s117 = sphi 0, %s117
      %s119 = sphi 0, %s117
      %s120 = sphi 0, %s119
      %s134 = sphi 0, %s120
      %s138 = sphi 0, %s138
      %s140 = sphi 0, %s138
      %s141 = sphi 0, %s140
      %s155 = sphi 0, %s141
      %s161 = sphi 0, %s163
      %s164 = sphi 0, %s161
      %s165 = sphi 0, %s164
      %s181 = sphi 0, %s165
    $region4: #{tpu_custom_call.1} parent=1 // loop_header_branch
      %18 = sbr.rel (%p16) target = $region8
    $region5: #{tpu_custom_call.1} parent=1 // loop_body
      %s20 = ssub.s32 %s15, 1
      %s21 = ssub.s32 %s15, 2
      %s22 = sadd.s32 %s15, 1
      %s23 = ssub.s32 %s15, %s22
      %p24 = scmp.eq.s32.totalorder %s23, 0
      %s26 = sadd.s32 %s25, 1
      %s27 = scalar_select %p24, %s25, %s26
      %p30 = pneg %p24
      %p31 = scmp.eq.s32.totalorder %s15, 1
      %p32 = por %p30, %p31
      %p33 = scmp.ne.s32.totalorder %s25, %s28
      %p34 = scmp.eq.s32.totalorder %s15, 0
      %p35 = por %p33, %p34
      %p36 = scmp.ne.s32.totalorder %s25, %s28
      %p37 = scmp.eq.s32.totalorder %s20, 1
      %p38 = por %p36, %p37
      %p39 = scmp.ne.s32.totalorder %s28, %s29
      %p40 = scmp.eq.s32.totalorder %s20, 0
      %p41 = por %p39, %p40
      %p42 = scmp.ne.s32.totalorder %s28, %s29
      %p43 = scmp.eq.s32.totalorder %s21, 1
      %p44 = por %p42, %p43
      %p46 = scmp.ne.s32.totalorder %s29, %s45
      %p47 = scmp.eq.s32.totalorder %s21, 0
      %p48 = por %p46, %p47
      %s49 = ssub.s32 %s15, %s22
      %p50 = scmp.eq.s32.totalorder %s49, 0
      %s52 = sadd.s32 %s51, 1
      %s53 = scalar_select %p50, %s51, %s52
      %p56 = pneg %p50
      %p57 = scmp.eq.s32.totalorder %s15, 1
      %p58 = por %p56, %p57
      %p59 = scmp.ne.s32.totalorder %s51, %s54
      %p60 = scmp.eq.s32.totalorder %s15, 0
      %p61 = por %p59, %p60
      %p62 = scmp.ne.s32.totalorder %s51, %s54
      %p63 = scmp.eq.s32.totalorder %s20, 1
      %p64 = por %p62, %p63
      %p65 = scmp.ne.s32.totalorder %s54, %s55
      %p66 = scmp.eq.s32.totalorder %s20, 0
      %p67 = por %p65, %p66
      %p68 = scmp.ne.s32.totalorder %s54, %s55
      %p69 = scmp.eq.s32.totalorder %s21, 1
      %p70 = por %p68, %p69
      %p72 = scmp.ne.s32.totalorder %s55, %s71
      %p73 = scmp.eq.s32.totalorder %s21, 0
      %p74 = por %p72, %p73
      %s76 = sadd.s32 %s75, 1
      %p79 = scmp.eq.s32.totalorder %s15, 1
      %p80 = scmp.ne.s32.totalorder %s75, %s77
      %p81 = scmp.eq.s32.totalorder %s15, 0
      %p82 = por %p80, %p81
      %p83 = scmp.ne.s32.totalorder %s75, %s77
      %p84 = scmp.eq.s32.totalorder %s20, 1
      %p85 = por %p83, %p84
      %p86 = scmp.ne.s32.totalorder %s77, %s78
      %p87 = scmp.eq.s32.totalorder %s20, 0
      %p88 = por %p86, %p87
      %p89 = scmp.ne.s32.totalorder %s77, %s78
      %p90 = scmp.eq.s32.totalorder %s21, 1
      %p91 = por %p89, %p90
      %p93 = scmp.ne.s32.totalorder %s78, %s92
      %p94 = scmp.eq.s32.totalorder %s21, 0
      %p95 = por %p93, %p94
      %s97 = sadd.s32 %s96, 1
      %p100 = scmp.eq.s32.totalorder %s15, 1
      %p101 = scmp.ne.s32.totalorder %s96, %s98
      %p102 = scmp.eq.s32.totalorder %s15, 0
      %p103 = por %p101, %p102
      %p104 = scmp.ne.s32.totalorder %s96, %s98
      %p105 = scmp.eq.s32.totalorder %s20, 1
      %p106 = por %p104, %p105
      %p107 = scmp.ne.s32.totalorder %s98, %s99
      %p108 = scmp.eq.s32.totalorder %s20, 0
      %p109 = por %p107, %p108
      %p110 = scmp.ne.s32.totalorder %s98, %s99
      %p111 = scmp.eq.s32.totalorder %s21, 1
      %p112 = por %p110, %p111
      %p114 = scmp.ne.s32.totalorder %s99, %s113
      %p115 = scmp.eq.s32.totalorder %s21, 0
      %p116 = por %p114, %p115
      %s118 = sadd.s32 %s117, 1
      %p121 = scmp.eq.s32.totalorder %s15, 1
      %p122 = scmp.ne.s32.totalorder %s117, %s119
      %p123 = scmp.eq.s32.totalorder %s15, 0
      %p124 = por %p122, %p123
      %p125 = scmp.ne.s32.totalorder %s117, %s119
      %p126 = scmp.eq.s32.totalorder %s20, 1
      %p127 = por %p125, %p126
      %p128 = scmp.ne.s32.totalorder %s119, %s120
      %p129 = scmp.eq.s32.totalorder %s20, 0
      %p130 = por %p128, %p129
      %p131 = scmp.ne.s32.totalorder %s119, %s120
      %p132 = scmp.eq.s32.totalorder %s21, 1
      %p133 = por %p131, %p132
      %p135 = scmp.ne.s32.totalorder %s120, %s134
      %p136 = scmp.eq.s32.totalorder %s21, 0
      %p137 = por %p135, %p136
      %s139 = sadd.s32 %s138, 1
      %p142 = scmp.eq.s32.totalorder %s15, 1
      %p143 = scmp.ne.s32.totalorder %s138, %s140
      %p144 = scmp.eq.s32.totalorder %s15, 0
      %p145 = por %p143, %p144
      %p146 = scmp.ne.s32.totalorder %s138, %s140
      %p147 = scmp.eq.s32.totalorder %s20, 1
      %p148 = por %p146, %p147
      %p149 = scmp.ne.s32.totalorder %s140, %s141
      %p150 = scmp.eq.s32.totalorder %s20, 0
      %p151 = por %p149, %p150
      %p152 = scmp.ne.s32.totalorder %s140, %s141
      %p153 = scmp.eq.s32.totalorder %s21, 1
      %p154 = por %p152, %p153
      %p156 = scmp.ne.s32.totalorder %s141, %s155
      %p157 = scmp.eq.s32.totalorder %s21, 0
      %p158 = por %p156, %p157
      %s159 = ssub.s32 %s15, %s22
      %p160 = scmp.eq.s32.totalorder %s159, 0
      %s162 = sadd.s32 %s161, 1
      %s163 = scalar_select %p160, %s161, %s162
      %p166 = pneg %p160
      %p167 = scmp.eq.s32.totalorder %s15, 1
      %p168 = por %p166, %p167
      %p169 = scmp.ne.s32.totalorder %s161, %s164
      %p170 = scmp.eq.s32.totalorder %s15, 0
      %p171 = por %p169, %p170
      %p172 = scmp.ne.s32.totalorder %s161, %s164
      %p173 = scmp.eq.s32.totalorder %s20, 1
      %p174 = por %p172, %p173
      %p175 = scmp.ne.s32.totalorder %s164, %s165
      %p176 = scmp.eq.s32.totalorder %s20, 0
      %p177 = por %p175, %p176
      %p178 = scmp.ne.s32.totalorder %s164, %s165
      %p179 = scmp.eq.s32.totalorder %s21, 1
      %p180 = por %p178, %p179
      %p182 = scmp.ne.s32.totalorder %s165, %s181
      %p183 = scmp.eq.s32.totalorder %s21, 0
      %p184 = por %p182, %p183
      %p185 = scmp.le.s32.totalorder 1, %s15
      %p186 = scmp.lt.s32.totalorder %s15, 3
      %p187 = pnand %p185, %p186
      %p188 = pneg %p187
      // Predicated region
      $region9: #{tpu_custom_call.1} parent=5 // pred_check
        _
      $region10: #{tpu_custom_call.1} parent=5 // pred_check_branch
        %190 = sbr.rel (%p187) target = $region12
      $region11: #{tpu_custom_call.1} parent=5 // pred_region
        %s191 = ssub.s32 %s15, 1
        // Predicated region
        $region13: #{tpu_custom_call.1} parent=11 // pred_check
          %p192 = pneg %p88
        $region14: #{tpu_custom_call.1} parent=11 // pred_check_branch
          %194 = sbr.rel (%p192) target = $region16
        $region15: #{tpu_custom_call.1} parent=11 // pred_region
          _
        $region16: #{tpu_custom_call.1} parent=11 // pred_fallthru
          _
        // Predicated region
        $region17: #{tpu_custom_call.1} parent=11 // pred_check
          %p195 = pneg %p109
        $region18: #{tpu_custom_call.1} parent=11 // pred_check_branch
          %197 = sbr.rel (%p195) target = $region20
        $region19: #{tpu_custom_call.1} parent=11 // pred_region
          _
        $region20: #{tpu_custom_call.1} parent=11 // pred_fallthru
          _
        // Predicated region
        $region21: #{tpu_custom_call.1} parent=11 // pred_check
          %p198 = pneg %p130
        $region22: #{tpu_custom_call.1} parent=11 // pred_check_branch
          %200 = sbr.rel (%p198) target = $region24
        $region23: #{tpu_custom_call.1} parent=11 // pred_region
          _
        $region24: #{tpu_custom_call.1} parent=11 // pred_fallthru
          _
        // Predicated region
        $region25: #{tpu_custom_call.1} parent=11 // pred_check
          %p201 = pneg %p151
        $region26: #{tpu_custom_call.1} parent=11 // pred_check_branch
          %203 = sbr.rel (%p201) target = $region28
        $region27: #{tpu_custom_call.1} parent=11 // pred_region
          _
        $region28: #{tpu_custom_call.1} parent=11 // pred_fallthru
          _
      $region12: #{tpu_custom_call.1} parent=5 // pred_fallthru
        _
      %p204 = scmp.lt.s32.totalorder %s15, 2
      // Predicated region
      $region29: #{tpu_custom_call.1} parent=5 // pred_check
        %p205 = pneg %p204
      $region30: #{tpu_custom_call.1} parent=5 // pred_check_branch
        %207 = sbr.rel (%p205) target = $region32
      $region31: #{tpu_custom_call.1} parent=5 // pred_region
        // Predicated region
        $region33: #{tpu_custom_call.1} parent=31 // pred_check
          %p208 = pneg %p35
        $region34: #{tpu_custom_call.1} parent=31 // pred_check_branch
          %210 = sbr.rel (%p208) target = $region36
        $region35: #{tpu_custom_call.1} parent=31 // pred_region
          %p211 = scmp.lt.s32.totalorder %s15, 1
          %s212 = scalar_select %p211, %s15, 1
          %s213 = smul.addr %s212, 3
          %s214 = smul.addr %s213, 8
          %s215 = scalar_lea.vmem %s0, %s214
        $region36: #{tpu_custom_call.1} parent=31 // pred_fallthru
          _
        // Predicated region
        $region37: #{tpu_custom_call.1} parent=31 // pred_check
          %p216 = pneg %p61
        $region38: #{tpu_custom_call.1} parent=31 // pred_check_branch
          %218 = sbr.rel (%p216) target = $region40
        $region39: #{tpu_custom_call.1} parent=31 // pred_region
          %p219 = scmp.lt.s32.totalorder %s15, 1
          %s220 = scalar_select %p219, %s15, 1
          %s221 = smul.addr %s220, 3
          %s222 = smul.addr %s221, 8
          %s223 = scalar_lea.vmem %s1, %s222
        $region40: #{tpu_custom_call.1} parent=31 // pred_fallthru
          _
      $region32: #{tpu_custom_call.1} parent=5 // pred_fallthru
        _
      %p224 = scmp.le.s32.totalorder 1, %s15
      %p225 = scmp.lt.s32.totalorder %s15, 3
      %p226 = pnand %p224, %p225
      %p227 = pneg %p226
      // Predicated region
      $region41: #{tpu_custom_call.1} parent=5 // pred_check
        _
      $region42: #{tpu_custom_call.1} parent=5 // pred_check_branch
        %229 = sbr.rel (%p226) target = $region44
      $region43: #{tpu_custom_call.1} parent=5 // pred_region
        %s230 = ssub.s32 %s15, 1
        %p231 = scmp.lt.s32.totalorder %s20, 1
        %s232 = scalar_select %p231, %s20, 1
        %s233 = smul.addr %s232, 3
        %s234 = smul.addr %s233, 8
        %s235 = scalar_lea.vmem %s0, %s234
        %p236 = pneg %p41
        %p237 = pneg %p38
        %p238 = scmp.lt.s32.totalorder %s20, 1
        %s239 = scalar_select %p238, %s20, 1
        %s240 = smul.addr %s239, 3
        %s241 = smul.addr %s240, 8
        %s242 = scalar_lea.vmem %s1, %s241
        %p243 = pneg %p67
        %p244 = pneg %p64
        %p245 = pneg %p88
        %p246 = pneg %p85
        %p247 = pneg %p109
        %p248 = pneg %p106
        %p249 = pneg %p130
        %p250 = pneg %p127
        %p251 = pneg %p151
        %p252 = pneg %p148
        %p253 = pneg %p177
        %p254 = pneg %p174
        %s255 = sand.u32 %s164, 1
        %s256 = scalar_lea.sflag [#allocation3], %s255
        %s257 = sand.u32 %s164, 1
        %s258 = smul.addr %s257, 24
        %s259 = scalar_lea.vmem [#allocation2], %s258
        %p260 = scmp.lt.s32.totalorder %s20, 1
        %s261 = scalar_select %p260, %s20, 1
        %s262 = smul.addr %s261, 3
        %s263 = smul.addr %s262, 8
        %s264 = scalar_lea.vmem %s0, %s263
        %p265 = scmp.lt.s32.totalorder %s20, 1
        %s266 = scalar_select %p265, %s20, 1
        %s267 = smul.addr %s266, 3
        %s268 = smul.addr %s267, 8
        %s269 = scalar_lea.vmem %s1, %s268
        %v270 = vlaneseq
        %v271 = vshrl.u32 %v270, 7
        %v272 = vadd.s32 %v271, 8
        %v273 = vadd.s32 %v271, 16
        %v274 = vld [vmem:[%s264] sm:$0xff]
        %v275 = vld [vmem:[%s264 + $0x8] sm:$0xff]
        %v276 = vld [vmem:[%s264 + $0x10] sm:$0xff]
        %v277 = vld [vmem:[%s269] sm:$0xff]
        %v278 = vld [vmem:[%s269 + $0x8] sm:$0xff]
        %v279 = vld [vmem:[%s269 + $0x10] sm:$0xff]
        %vm280 = vcmp.ge.s32.totalorder %v271, 3
        %vm281 = vcmp.ge.s32.totalorder %v272, 3
        %vm282 = vcmp.ge.s32.totalorder %v273, 3
        %v283 = vrot.slane %v277, 5
        %v284 = vrot.slane %v278, 5
        %v285 = vrot.slane %v279, 5
        %vm286 = vcmp.lt.s32.totalorder %v271, 3
        %v287 = vsel %vm286, %v284, %v285
        %v288 = vsel %vm286, %v283, %v284
        %v289 = vsel %vm286, %v285, %v283
        %v290 = vsel %vm280, 1, 0
        %v291 = vsel %vm281, 1, 0
        %v292 = vsel %vm282, 1, 0
        %vm293 = vcmp.eq.s32.totalorder %v290, 1
        %vm294 = vcmp.eq.s32.totalorder %v291, 1
        %vm295 = vcmp.eq.s32.totalorder %v292, 1
        %v296 = vsel %vm293, %v289, 0.0
        %v297 = vsel %vm294, %v288, 0.0
        %v298 = vsel %vm295, %v287, 0.0
        %vm299 = vcmp.ge.s32.totalorder %v271, 2
        %vm300 = vcmp.ge.s32.totalorder %v272, 2
        %vm301 = vcmp.ge.s32.totalorder %v273, 2
        %v302 = vrot.slane %v277, 6
        %v303 = vrot.slane %v278, 6
        %v304 = vrot.slane %v279, 6
        %vm305 = vcmp.lt.s32.totalorder %v271, 2
        %v306 = vsel %vm305, %v303, %v304
        %v307 = vsel %vm305, %v302, %v303
        %v308 = vsel %vm305, %v304, %v302
        %v309 = vsel %vm299, 1, 0
        %v310 = vsel %vm300, 1, 0
        %v311 = vsel %vm301, 1, 0
        %vm312 = vcmp.eq.s32.totalorder %v309, 1
        %vm313 = vcmp.eq.s32.totalorder %v310, 1
        %vm314 = vcmp.eq.s32.totalorder %v311, 1
        %v315 = vsel %vm312, %v308, 0.0
        %v316 = vsel %vm313, %v307, 0.0
        %v317 = vsel %vm314, %v306, 0.0
        %vm318 = vcmp.ge.s32.totalorder %v271, 1
        %vm319 = vcmp.ge.s32.totalorder %v272, 1
        %vm320 = vcmp.ge.s32.totalorder %v273, 1
        %v321 = vrot.slane %v277, 7
        %v322 = vrot.slane %v278, 7
        %v323 = vrot.slane %v279, 7
        %vm324 = vcmp.lt.s32.totalorder %v271, 1
        %v325 = vsel %vm324, %v322, %v323
        %v326 = vsel %vm324, %v321, %v322
        %v327 = vsel %vm324, %v323, %v321
        %v328 = vsel %vm318, 1, 0
        %v329 = vsel %vm319, 1, 0
        %v330 = vsel %vm320, 1, 0
        %vm331 = vcmp.eq.s32.totalorder %v328, 1
        %vm332 = vcmp.eq.s32.totalorder %v329, 1
        %vm333 = vcmp.eq.s32.totalorder %v330, 1
        %v334 = vsel %vm331, %v327, 0.0
        %v335 = vsel %vm332, %v326, 0.0
        %v336 = vsel %vm333, %v325, 0.0
        %340 = vrot.lane.b32.xlu0 %v315, 32
        %v341 = vpop.permute.xlu0 %340
        %342 = vrot.lane.b32.xlu0 %v316, 32
        %v343 = vpop.permute.xlu0 %342
        %344 = vrot.lane.b32.xlu0 %v317, 32
        %v345 = vpop.permute.xlu0 %344
        %352 = vrot.lane.b32.xlu0 %v334, 64
        %v353 = vpop.permute.xlu0 %352
        %354 = vrot.lane.b32.xlu0 %v335, 64
        %v355 = vpop.permute.xlu0 %354
        %356 = vrot.lane.b32.xlu0 %v336, 64
        %v357 = vpop.permute.xlu0 %356
        %364 = vrot.lane.b32.xlu0 %v277, 96
        %v365 = vpop.permute.xlu0 %364
        %366 = vrot.lane.b32.xlu0 %v278, 96
        %v367 = vpop.permute.xlu0 %366
        %368 = vrot.lane.b32.xlu0 %v279, 96
        %v369 = vpop.permute.xlu0 %368
        %vm373 = vcmask 261120
        %v374 = vsel %vm373, %v296, %v341
        %v375 = vsel %vm373, %v297, %v343
        %v376 = vsel %vm373, %v298, %v345
        %vm377 = vcmask 523264
        %v378 = vsel %vm377, %v374, %v353
        %v379 = vsel %vm377, %v375, %v355
        %v380 = vsel %vm377, %v376, %v357
        %vm381 = vcmask 785408
        %v382 = vsel %vm381, %v378, %v365
        %v383 = vsel %vm381, %v379, %v367
        %v384 = vsel %vm381, %v380, %v369
        %v385 = vld [vmem:[%s4] sm:$0xff]
        %v386 = vld [vmem:[%s4 + $0x8] sm:$0xff]
        %v387 = vld [vmem:[%s4 + $0x10] sm:$0xff]
        %v388 = vld [vmem:[%s4 + $0x18] sm:$0xff]
        %v389 = vld [vmem:[%s4 + $0x20] sm:$0xff]
        %v390 = vld [vmem:[%s4 + $0x28] sm:$0xff]
        %v391 = vld [vmem:[%s4 + $0x30] sm:$0xff]
        %v392 = vld [vmem:[%s4 + $0x38] sm:$0xff]
        %v393 = vld [vmem:[%s4 + $0x40] sm:$0xff]
        %v394 = vld [vmem:[%s4 + $0x48] sm:$0xff]
        %v395 = vld [vmem:[%s4 + $0x50] sm:$0xff]
        %v396 = vld [vmem:[%s4 + $0x58] sm:$0xff]
        %v397 = vld [vmem:[%s4 + $0x60] sm:$0xff]
        %v398 = vld [vmem:[%s4 + $0x68] sm:$0xff]
        %v399 = vld [vmem:[%s4 + $0x70] sm:$0xff]
        %v400 = vld [vmem:[%s4 + $0x78] sm:$0xff]
        %v401 = vld [vmem:[%s5] sm:$0x1]
        %v402 = vperm.slane %v401, 0
        %403 = vmatpush.msra.mxu0 %v400
        %404 = vmatpush.msra.mxu0 %v399
        %405 = vmatpush.msra.mxu0 %v398
        %406 = vmatpush.msra.mxu0 %v397
        %407 = vmatpush.msra.mxu0 %v396
        %408 = vmatpush.msra.mxu0 %v395
        %409 = vmatpush.msra.mxu0 %v394
        %410 = vmatpush.msra.mxu0 %v393
        %411 = vmatpush.msra.mxu0 %v392
        %412 = vmatpush.msra.mxu0 %v391
        %413 = vmatpush.msra.mxu0 %v390
        %414 = vmatpush.msra.mxu0 %v389
        %415 = vmatpush.msra.mxu0 %v388
        %416 = vmatpush.msra.mxu0 %v387
        %417 = vmatpush.msra.mxu0 %v386
        %418 = vmatpush.msra.mxu0 %v385
        %419 = vmatmul.f32.gmra.mxu0 %v382
        %v420 = vpop.f32.mrf.mxu0
        %v421 = vadd.f32 %v402, %v420
        %422 = vmatmul.f32.gmra.mxu0 %v383
        %v423 = vpop.f32.mrf.mxu0
        %v424 = vadd.f32 %v402, %v423
        %425 = vmatmul.f32.gmra.mxu0 %v384
        %v426 = vpop.f32.mrf.mxu0
        %v427 = vadd.f32 %v402, %v426
        %428 = vdwg.mxu0
        %v429 = vand.u32 2147483647, %v421
        %v430 = vand.u32 2147483647, %v424
        %v431 = vand.u32 2147483647, %v427
        %v432 = vadd.f32 %v429, 1.0
        %v433 = vadd.f32 %v430, 1.0
        %v434 = vadd.f32 %v431, 1.0
        %v435 = vrcp.pop %v432
        %v436 = vrcp.pop %v433
        %v437 = vrcp.pop %v434
        %v438 = vmul.f32 %v421, %v435
        %v439 = vmul.f32 %v424, %v436
        %v440 = vmul.f32 %v427, %v437
        %v441 = vld [vmem:[%s2] sm:$0xff]
        %v442 = vld [vmem:[%s2 + $0x8] sm:$0xff]
        %v443 = vld [vmem:[%s2 + $0x10] sm:$0xff]
        %v444 = vld [vmem:[%s2 + $0x18] sm:$0xff]
        %v445 = vld [vmem:[%s2 + $0x20] sm:$0xff]
        %v446 = vld [vmem:[%s2 + $0x28] sm:$0xff]
        %v447 = vld [vmem:[%s2 + $0x30] sm:$0xff]
        %v448 = vld [vmem:[%s2 + $0x38] sm:$0xff]
        %v449 = vld [vmem:[%s2 + $0x40] sm:$0xff]
        %v450 = vld [vmem:[%s3] sm:$0x1]
        %v451 = vperm.slane %v450, 0
        %vm452 = vcmask 588800
        %v454 = vsel %vm452, %v274, 0
        %v457 = vsel %vm452, %v275, 0
        %v460 = vsel %vm452, %v276, 0
        %462 = vmatpush.msra.mxu0 0.0
        %463 = vmatpush.msra.mxu0 0.0
        %464 = vmatpush.msra.mxu0 0.0
        %465 = vmatpush.msra.mxu0 0.0
        %466 = vmatpush.msra.mxu0 0.0
        %467 = vmatpush.msra.mxu0 0.0
        %468 = vmatpush.msra.mxu0 0.0
        %469 = vmatpush.msra.mxu0 %v449
        %470 = vmatpush.msra.mxu0 %v448
        %471 = vmatpush.msra.mxu0 %v447
        %472 = vmatpush.msra.mxu0 %v446
        %473 = vmatpush.msra.mxu0 %v445
        %474 = vmatpush.msra.mxu0 %v444
        %475 = vmatpush.msra.mxu0 %v443
        %476 = vmatpush.msra.mxu0 %v442
        %477 = vmatpush.msra.mxu0 %v441
        %478 = vmatmul.f32.gmra.mxu0 %v454
        %v479 = vpop.f32.mrf.mxu0
        %v480 = vadd.f32 %v451, %v479
        %481 = vmatmul.f32.gmra.mxu0 %v457
        %v482 = vpop.f32.mrf.mxu0
        %v483 = vadd.f32 %v451, %v482
        %484 = vmatmul.f32.gmra.mxu0 %v460
        %v485 = vpop.f32.mrf.mxu0
        %v486 = vadd.f32 %v451, %v485
        %487 = vdwg.mxu0
        %v488 = vrot.slane %v438, 5
        %v489 = vrot.slane %v439, 5
        %v490 = vrot.slane %v440, 5
        %v491 = vsel %vm286, %v489, %v490
        %v492 = vsel %vm286, %v488, %v489
        %v493 = vsel %vm286, %v490, %v488
        %v494 = vsel %vm293, %v493, 0.0
        %v495 = vsel %vm294, %v492, 0.0
        %v496 = vsel %vm295, %v491, 0.0
        %v497 = vrot.slane %v438, 6
        %v498 = vrot.slane %v439, 6
        %v499 = vrot.slane %v440, 6
        %v500 = vsel %vm305, %v498, %v499
        %v501 = vsel %vm305, %v497, %v498
        %v502 = vsel %vm305, %v499, %v497
        %v503 = vsel %vm312, %v502, 0.0
        %v504 = vsel %vm313, %v501, 0.0
        %v505 = vsel %vm314, %v500, 0.0
        %v506 = vrot.slane %v438, 7
        %v507 = vrot.slane %v439, 7
        %v508 = vrot.slane %v440, 7
        %v509 = vsel %vm324, %v507, %v508
        %v510 = vsel %vm324, %v506, %v507
        %v511 = vsel %vm324, %v508, %v506
        %v512 = vsel %vm331, %v511, 0.0
        %v513 = vsel %vm332, %v510, 0.0
        %v514 = vsel %vm333, %v509, 0.0
        %518 = vrot.lane.b32.xlu0 %v503, 16
        %v519 = vpop.permute.xlu0 %518
        %520 = vrot.lane.b32.xlu0 %v504, 16
        %v521 = vpop.permute.xlu0 %520
        %522 = vrot.lane.b32.xlu0 %v505, 16
        %v523 = vpop.permute.xlu0 %522
        %530 = vrot.lane.b32.xlu0 %v512, 32
        %v531 = vpop.permute.xlu0 %530
        %532 = vrot.lane.b32.xlu0 %v513, 32
        %v533 = vpop.permute.xlu0 %532
        %534 = vrot.lane.b32.xlu0 %v514, 32
        %v535 = vpop.permute.xlu0 %534
        %542 = vrot.lane.b32.xlu0 %v438, 48
        %v543 = vpop.permute.xlu0 %542
        %544 = vrot.lane.b32.xlu0 %v439, 48
        %v545 = vpop.permute.xlu0 %544
        %546 = vrot.lane.b32.xlu0 %v440, 48
        %v547 = vpop.permute.xlu0 %546
        %vm551 = vcmask 130048
        %v552 = vsel %vm551, %v494, %v519
        %v553 = vsel %vm551, %v495, %v521
        %v554 = vsel %vm551, %v496, %v523
        %v555 = vsel %vm373, %v552, %v531
        %v556 = vsel %vm373, %v553, %v533
        %v557 = vsel %vm373, %v554, %v535
        %vm558 = vcmask 392192
        %v559 = vsel %vm558, %v555, %v543
        %v560 = vsel %vm558, %v556, %v545
        %v561 = vsel %vm558, %v557, %v547
        %v562 = vld [vmem:[%s2 + $0x48] sm:$0xff]
        %v563 = vld [vmem:[%s2 + $0x50] sm:$0xff]
        %v564 = vld [vmem:[%s2 + $0x58] sm:$0xff]
        %v565 = vld [vmem:[%s2 + $0x60] sm:$0xff]
        %v566 = vld [vmem:[%s2 + $0x68] sm:$0xff]
        %v567 = vld [vmem:[%s2 + $0x70] sm:$0xff]
        %v568 = vld [vmem:[%s2 + $0x78] sm:$0xff]
        %v569 = vld [vmem:[%s2 + $0x80] sm:$0xff]
        %v570 = vld [vmem:[%s3 + $0x1] sm:$0x1]
        %v571 = vperm.slane %v570, 0
        %v573 = vsel %vm377, %v559, 0
        %v576 = vsel %vm377, %v560, 0
        %v579 = vsel %vm377, %v561, 0
        %581 = vmatpush.msra.mxu0 0.0
        %582 = vmatpush.msra.mxu0 0.0
        %583 = vmatpush.msra.mxu0 0.0
        %584 = vmatpush.msra.mxu0 0.0
        %585 = vmatpush.msra.mxu0 0.0
        %586 = vmatpush.msra.mxu0 0.0
        %587 = vmatpush.msra.mxu0 0.0
        %588 = vmatpush.msra.mxu0 0.0
        %589 = vmatpush.msra.mxu0 %v569
        %590 = vmatpush.msra.mxu0 %v568
        %591 = vmatpush.msra.mxu0 %v567
        %592 = vmatpush.msra.mxu0 %v566
        %593 = vmatpush.msra.mxu0 %v565
        %594 = vmatpush.msra.mxu0 %v564
        %595 = vmatpush.msra.mxu0 %v563
        %596 = vmatpush.msra.mxu0 %v562
        %597 = vmatmul.f32.gmra.mxu0 %v573
        %v598 = vpop.f32.mrf.mxu0
        %v599 = vadd.f32 %v571, %v598
        %600 = vmatmul.f32.gmra.mxu0 %v576
        %v601 = vpop.f32.mrf.mxu0
        %v602 = vadd.f32 %v571, %v601
        %603 = vmatmul.f32.gmra.mxu0 %v579
        %v604 = vpop.f32.mrf.mxu0
        %v605 = vadd.f32 %v571, %v604
        %606 = vdwg.mxu0
        %v607 = vmul.f32 %v480, %v599
        %v608 = vmul.f32 %v483, %v602
        %v609 = vmul.f32 %v486, %v605
        %v610 = vxor.u32 %v607, 2147483648
        %v611 = vxor.u32 %v608, 2147483648
        %v612 = vxor.u32 %v609, 2147483648
        %v613 = vmul.f32 %v610, 1.442695
        %v614 = vpow.pop %v613
        %v615 = vmul.f32 %v611, 1.442695
        %v616 = vpow.pop %v615
        %v617 = vmul.f32 %v612, 1.442695
        %v618 = vpow.pop %v617
        %v619 = vadd.f32 %v614, 1.0
        %v620 = vadd.f32 %v616, 1.0
        %v621 = vadd.f32 %v618, 1.0
        %v622 = vrcp.pop %v619
        %v623 = vmul.f32 %v619, %v622
        %v624 = vsub.f32 1.0, %v623
        %v625 = vmul.f32 %v622, %v624
        %v626 = vadd.f32 %v622, %v625
        %vm627 = vweird.f32 %v619
        %vm628 = vweird.f32 %v622
        %vm629 = vmor %vm627, %vm628
        %v630 = vsel %vm629, %v622, %v626
        %v631 = vand.u32 2147483647, %v619
        %vm632 = vcmp.eq.f32.partialorder %v631, 8.507059e+37
        %v633 = vand.u32 %v619, 2147483648
        %v634 = vor.u32 1.1754944e-38, %v633
        %v635 = vsel %vm632, %v634, %v630
        %v636 = vmul.f32 1.0, %v635
        %v637 = vrcp.pop %v620
        %v638 = vmul.f32 %v620, %v637
        %v639 = vsub.f32 1.0, %v638
        %v640 = vmul.f32 %v637, %v639
        %v641 = vadd.f32 %v637, %v640
        %vm642 = vweird.f32 %v620
        %vm643 = vweird.f32 %v637
        %vm644 = vmor %vm642, %vm643
        %v645 = vsel %vm644, %v637, %v641
        %v646 = vand.u32 2147483647, %v620
        %vm647 = vcmp.eq.f32.partialorder %v646, 8.507059e+37
        %v648 = vand.u32 %v620, 2147483648
        %v649 = vor.u32 1.1754944e-38, %v648
        %v650 = vsel %vm647, %v649, %v645
        %v651 = vmul.f32 1.0, %v650
        %v652 = vrcp.pop %v621
        %v653 = vmul.f32 %v621, %v652
        %v654 = vsub.f32 1.0, %v653
        %v655 = vmul.f32 %v652, %v654
        %v656 = vadd.f32 %v652, %v655
        %vm657 = vweird.f32 %v621
        %vm658 = vweird.f32 %v652
        %vm659 = vmor %vm657, %vm658
        %v660 = vsel %vm659, %v652, %v656
        %v661 = vand.u32 2147483647, %v621
        %vm662 = vcmp.eq.f32.partialorder %v661, 8.507059e+37
        %v663 = vand.u32 %v621, 2147483648
        %v664 = vor.u32 1.1754944e-38, %v663
        %v665 = vsel %vm662, %v664, %v660
        %v666 = vmul.f32 1.0, %v665
        %v667 = vsub.f32 1.0, %v636
        %v668 = vsub.f32 1.0, %v651
        %v669 = vsub.f32 1.0, %v666
        %v670 = vtanh.pop %v607
        %v671 = vtanh.pop %v608
        %v672 = vtanh.pop %v609
        %676 = vrot.lane.b32.xlu0 %v670, 112
        %v677 = vpop.permute.xlu0 %676
        %678 = vrot.lane.b32.xlu0 %v671, 112
        %v679 = vpop.permute.xlu0 %678
        %680 = vrot.lane.b32.xlu0 %v672, 112
        %v681 = vpop.permute.xlu0 %680
        %v685 = vmul.f32 %v667, %v677
        %v686 = vmul.f32 %v668, %v679
        %v687 = vmul.f32 %v669, %v681
        %v688 = vmul.f32 %v636, %v438
        %v689 = vmul.f32 %v651, %v439
        %v690 = vmul.f32 %v666, %v440
        %v691 = vadd.f32 %v685, %v688
        %v692 = vadd.f32 %v686, %v689
        %v693 = vadd.f32 %v687, %v690
        %v694 = vld [vmem:[%s2 + $0x88] sm:$0xff]
        %v695 = vld [vmem:[%s2 + $0x90] sm:$0xff]
        %v696 = vld [vmem:[%s3 + $0x2] sm:$0x1]
        %v697 = vperm.slane %v696, 0
        %v699 = vsel %vm551, %v691, 0
        %v702 = vsel %vm551, %v692, 0
        %v705 = vsel %vm551, %v693, 0
        %707 = vmatpush.msra.mxu0 0.0
        %708 = vmatpush.msra.mxu0 0.0
        %709 = vmatpush.msra.mxu0 0.0
        %710 = vmatpush.msra.mxu0 0.0
        %711 = vmatpush.msra.mxu0 0.0
        %712 = vmatpush.msra.mxu0 0.0
        %713 = vmatpush.msra.mxu0 0.0
        %714 = vmatpush.msra.mxu0 0.0
        %715 = vmatpush.msra.mxu0 0.0
        %716 = vmatpush.msra.mxu0 0.0
        %717 = vmatpush.msra.mxu0 0.0
        %718 = vmatpush.msra.mxu0 0.0
        %719 = vmatpush.msra.mxu0 0.0
        %720 = vmatpush.msra.mxu0 0.0
        %721 = vmatpush.msra.mxu0 %v695
        %722 = vmatpush.msra.mxu0 %v694
        %723 = vmatmul.f32.gmra.mxu0 %v699
        %v724 = vpop.f32.mrf.mxu0
        %v725 = vadd.f32 %v697, %v724
        %726 = vmatmul.f32.gmra.mxu0 %v702
        %v727 = vpop.f32.mrf.mxu0
        %v728 = vadd.f32 %v697, %v727
        %729 = vmatmul.f32.gmra.mxu0 %v705
        %v730 = vpop.f32.mrf.mxu0
        %v731 = vadd.f32 %v697, %v730
        %732 = vdwg.mxu0
        %s733 = scalar_lea.vmem %s2, 152
        %v734 = vld [vmem:[%s733] sm:$0xff]
        %v735 = vld [vmem:[%s733 + $0x8] sm:$0xff]
        %v736 = vld [vmem:[%s733 + $0x10] sm:$0xff]
        %v737 = vld [vmem:[%s733 + $0x18] sm:$0xff]
        %v738 = vld [vmem:[%s733 + $0x20] sm:$0xff]
        %v739 = vld [vmem:[%s733 + $0x28] sm:$0xff]
        %v740 = vld [vmem:[%s733 + $0x30] sm:$0xff]
        %v741 = vld [vmem:[%s733 + $0x38] sm:$0xff]
        %v742 = vld [vmem:[%s733 + $0x40] sm:$0xff]
        %s743 = scalar_lea.vmem %s3, 4
        %v744 = vld [vmem:[%s743] sm:$0x1]
        %v745 = vperm.slane %v744, 0
        %746 = vmatpush.msra.mxu0 0.0
        %747 = vmatpush.msra.mxu0 0.0
        %748 = vmatpush.msra.mxu0 0.0
        %749 = vmatpush.msra.mxu0 0.0
        %750 = vmatpush.msra.mxu0 0.0
        %751 = vmatpush.msra.mxu0 0.0
        %752 = vmatpush.msra.mxu0 0.0
        %753 = vmatpush.msra.mxu0 %v742
        %754 = vmatpush.msra.mxu0 %v741
        %755 = vmatpush.msra.mxu0 %v740
        %756 = vmatpush.msra.mxu0 %v739
        %757 = vmatpush.msra.mxu0 %v738
        %758 = vmatpush.msra.mxu0 %v737
        %759 = vmatpush.msra.mxu0 %v736
        %760 = vmatpush.msra.mxu0 %v735
        %761 = vmatpush.msra.mxu0 %v734
        %762 = vmatmul.f32.gmra.mxu0 %v454
        %v763 = vpop.f32.mrf.mxu0
        %v764 = vadd.f32 %v745, %v763
        %765 = vmatmul.f32.gmra.mxu0 %v457
        %v766 = vpop.f32.mrf.mxu0
        %v767 = vadd.f32 %v745, %v766
        %768 = vmatmul.f32.gmra.mxu0 %v460
        %v769 = vpop.f32.mrf.mxu0
        %v770 = vadd.f32 %v745, %v769
        %771 = vdwg.mxu0
        %vm772 = vcmp.ge.s32.totalorder %v271, 12
        %vm773 = vcmp.ge.s32.totalorder %v272, 12
        %vm774 = vcmp.ge.s32.totalorder %v273, 12
        %v775 = vrot.slane %v691, 4
        %v776 = vrot.slane %v692, 4
        %v777 = vrot.slane %v693, 4
        %vm778 = vcmp.lt.s32.totalorder %v271, 4
        %v779 = vsel %vm778, %v776, %v777
        %v780 = vsel %vm778, %v775, %v776
        %v781 = vsel %vm778, %v777, %v775
        %v782 = vsel %vm772, 1, 0
        %v783 = vsel %vm773, 1, 0
        %v784 = vsel %vm774, 1, 0
        %vm785 = vcmp.eq.s32.totalorder %v782, 1
        %vm786 = vcmp.eq.s32.totalorder %v783, 1
        %vm787 = vcmp.eq.s32.totalorder %v784, 1
        %v788 = vsel %vm785, %v779, 0.0
        %v789 = vsel %vm786, %v781, 0.0
        %v790 = vsel %vm787, %v780, 0.0
        %vm791 = vcmp.ge.s32.totalorder %v271, 8
        %vm792 = vcmp.ge.s32.totalorder %v272, 8
        %vm793 = vcmp.ge.s32.totalorder %v273, 8
        %v794 = vsel %vm791, 1, 0
        %v795 = vsel %vm792, 1, 0
        %v796 = vsel %vm793, 1, 0
        %vm797 = vcmp.eq.s32.totalorder %v794, 1
        %vm798 = vcmp.eq.s32.totalorder %v795, 1
        %vm799 = vcmp.eq.s32.totalorder %v796, 1
        %v800 = vsel %vm797, %v693, 0.0
        %v801 = vsel %vm798, %v691, 0.0
        %v802 = vsel %vm799, %v692, 0.0
        %vm803 = vcmp.ge.s32.totalorder %v271, 4
        %vm804 = vcmp.ge.s32.totalorder %v272, 4
        %vm805 = vcmp.ge.s32.totalorder %v273, 4
        %v806 = vsel %vm803, 1, 0
        %v807 = vsel %vm804, 1, 0
        %v808 = vsel %vm805, 1, 0
        %vm809 = vcmp.eq.s32.totalorder %v806, 1
        %vm810 = vcmp.eq.s32.totalorder %v807, 1
        %vm811 = vcmp.eq.s32.totalorder %v808, 1
        %v812 = vsel %vm809, %v781, 0.0
        %v813 = vsel %vm810, %v780, 0.0
        %v814 = vsel %vm811, %v779, 0.0
        %818 = vrot.lane.b32.xlu0 %v800, 16
        %v819 = vpop.permute.xlu0 %818
        %820 = vrot.lane.b32.xlu0 %v801, 16
        %v821 = vpop.permute.xlu0 %820
        %822 = vrot.lane.b32.xlu0 %v802, 16
        %v823 = vpop.permute.xlu0 %822
        %830 = vrot.lane.b32.xlu0 %v812, 32
        %v831 = vpop.permute.xlu0 %830
        %832 = vrot.lane.b32.xlu0 %v813, 32
        %v833 = vpop.permute.xlu0 %832
        %834 = vrot.lane.b32.xlu0 %v814, 32
        %v835 = vpop.permute.xlu0 %834
        %839 = vrot.lane.b32.xlu0 %v691, 48
        %v840 = vpop.permute.xlu0 %839
        %841 = vrot.lane.b32.xlu0 %v692, 48
        %v842 = vpop.permute.xlu0 %841
        %843 = vrot.lane.b32.xlu0 %v693, 48
        %v844 = vpop.permute.xlu0 %843
        %v848 = vsel %vm551, %v788, %v819
        %v849 = vsel %vm551, %v789, %v821
        %v850 = vsel %vm551, %v790, %v823
        %v851 = vsel %vm373, %v848, %v831
        %v852 = vsel %vm373, %v849, %v833
        %v853 = vsel %vm373, %v850, %v835
        %v854 = vsel %vm558, %v851, %v840
        %v855 = vsel %vm558, %v852, %v842
        %v856 = vsel %vm558, %v853, %v844
        %v857 = vld [vmem:[%s733 + $0x48] sm:$0xff]
        %v858 = vld [vmem:[%s733 + $0x50] sm:$0xff]
        %v859 = vld [vmem:[%s733 + $0x58] sm:$0xff]
        %v860 = vld [vmem:[%s733 + $0x60] sm:$0xff]
        %v861 = vld [vmem:[%s733 + $0x68] sm:$0xff]
        %v862 = vld [vmem:[%s733 + $0x70] sm:$0xff]
        %v863 = vld [vmem:[%s733 + $0x78] sm:$0xff]
        %v864 = vld [vmem:[%s733 + $0x80] sm:$0xff]
        %v865 = vld [vmem:[%s743 + $0x1] sm:$0x1]
        %v866 = vperm.slane %v865, 0
        %v868 = vsel %vm377, %v854, 0
        %v871 = vsel %vm377, %v855, 0
        %v874 = vsel %vm377, %v856, 0
        %876 = vmatpush.msra.mxu0 0.0
        %877 = vmatpush.msra.mxu0 0.0
        %878 = vmatpush.msra.mxu0 0.0
        %879 = vmatpush.msra.mxu0 0.0
        %880 = vmatpush.msra.mxu0 0.0
        %881 = vmatpush.msra.mxu0 0.0
        %882 = vmatpush.msra.mxu0 0.0
        %883 = vmatpush.msra.mxu0 0.0
        %884 = vmatpush.msra.mxu0 %v864
        %885 = vmatpush.msra.mxu0 %v863
        %886 = vmatpush.msra.mxu0 %v862
        %887 = vmatpush.msra.mxu0 %v861
        %888 = vmatpush.msra.mxu0 %v860
        %889 = vmatpush.msra.mxu0 %v859
        %890 = vmatpush.msra.mxu0 %v858
        %891 = vmatpush.msra.mxu0 %v857
        %892 = vmatmul.f32.gmra.mxu0 %v868
        %v893 = vpop.f32.mrf.mxu0
        %v894 = vadd.f32 %v866, %v893
        %895 = vmatmul.f32.gmra.mxu0 %v871
        %v896 = vpop.f32.mrf.mxu0
        %v897 = vadd.f32 %v866, %v896
        %898 = vmatmul.f32.gmra.mxu0 %v874
        %v899 = vpop.f32.mrf.mxu0
        %v900 = vadd.f32 %v866, %v899
        %901 = vdwg.mxu0
        %v902 = vmul.f32 %v764, %v894
        %v903 = vmul.f32 %v767, %v897
        %v904 = vmul.f32 %v770, %v900
        %v905 = vxor.u32 %v902, 2147483648
        %v906 = vxor.u32 %v903, 2147483648
        %v907 = vxor.u32 %v904, 2147483648
        %v908 = vmul.f32 %v905, 1.442695
        %v909 = vpow.pop %v908
        %v910 = vmul.f32 %v906, 1.442695
        %v911 = vpow.pop %v910
        %v912 = vmul.f32 %v907, 1.442695
        %v913 = vpow.pop %v912
        %v914 = vadd.f32 %v909, 1.0
        %v915 = vadd.f32 %v911, 1.0
        %v916 = vadd.f32 %v913, 1.0
        %v917 = vrcp.pop %v914
        %v918 = vmul.f32 %v914, %v917
        %v919 = vsub.f32 1.0, %v918
        %v920 = vmul.f32 %v917, %v919
        %v921 = vadd.f32 %v917, %v920
        %vm922 = vweird.f32 %v914
        %vm923 = vweird.f32 %v917
        %vm924 = vmor %vm922, %vm923
        %v925 = vsel %vm924, %v917, %v921
        %v926 = vand.u32 2147483647, %v914
        %vm927 = vcmp.eq.f32.partialorder %v926, 8.507059e+37
        %v928 = vand.u32 %v914, 2147483648
        %v929 = vor.u32 1.1754944e-38, %v928
        %v930 = vsel %vm927, %v929, %v925
        %v931 = vmul.f32 1.0, %v930
        %v932 = vrcp.pop %v915
        %v933 = vmul.f32 %v915, %v932
        %v934 = vsub.f32 1.0, %v933
        %v935 = vmul.f32 %v932, %v934
        %v936 = vadd.f32 %v932, %v935
        %vm937 = vweird.f32 %v915
        %vm938 = vweird.f32 %v932
        %vm939 = vmor %vm937, %vm938
        %v940 = vsel %vm939, %v932, %v936
        %v941 = vand.u32 2147483647, %v915
        %vm942 = vcmp.eq.f32.partialorder %v941, 8.507059e+37
        %v943 = vand.u32 %v915, 2147483648
        %v944 = vor.u32 1.1754944e-38, %v943
        %v945 = vsel %vm942, %v944, %v940
        %v946 = vmul.f32 1.0, %v945
        %v947 = vrcp.pop %v916
        %v948 = vmul.f32 %v916, %v947
        %v949 = vsub.f32 1.0, %v948
        %v950 = vmul.f32 %v947, %v949
        %v951 = vadd.f32 %v947, %v950
        %vm952 = vweird.f32 %v916
        %vm953 = vweird.f32 %v947
        %vm954 = vmor %vm952, %vm953
        %v955 = vsel %vm954, %v947, %v951
        %v956 = vand.u32 2147483647, %v916
        %vm957 = vcmp.eq.f32.partialorder %v956, 8.507059e+37
        %v958 = vand.u32 %v916, 2147483648
        %v959 = vor.u32 1.1754944e-38, %v958
        %v960 = vsel %vm957, %v959, %v955
        %v961 = vmul.f32 1.0, %v960
        %v962 = vsub.f32 1.0, %v931
        %v963 = vsub.f32 1.0, %v946
        %v964 = vsub.f32 1.0, %v961
        %v965 = vtanh.pop %v902
        %v966 = vtanh.pop %v903
        %v967 = vtanh.pop %v904
        %971 = vrot.lane.b32.xlu0 %v965, 112
        %v972 = vpop.permute.xlu0 %971
        %973 = vrot.lane.b32.xlu0 %v966, 112
        %v974 = vpop.permute.xlu0 %973
        %975 = vrot.lane.b32.xlu0 %v967, 112
        %v976 = vpop.permute.xlu0 %975
        %v980 = vmul.f32 %v962, %v972
        %v981 = vmul.f32 %v963, %v974
        %v982 = vmul.f32 %v964, %v976
        %v983 = vmul.f32 %v931, %v691
        %v984 = vmul.f32 %v946, %v692
        %v985 = vmul.f32 %v961, %v693
        %v986 = vadd.f32 %v980, %v983
        %v987 = vadd.f32 %v981, %v984
        %v988 = vadd.f32 %v982, %v985
        %v989 = vld [vmem:[%s733 + $0x88] sm:$0xff]
        %v990 = vld [vmem:[%s733 + $0x90] sm:$0xff]
        %v992 = vsel %vm551, %v986, 0
        %v995 = vsel %vm551, %v987, 0
        %v998 = vsel %vm551, %v988, 0
        %1000 = vmatpush.msra.mxu0 0.0
        %1001 = vmatpush.msra.mxu0 0.0
        %1002 = vmatpush.msra.mxu0 0.0
        %1003 = vmatpush.msra.mxu0 0.0
        %1004 = vmatpush.msra.mxu0 0.0
        %1005 = vmatpush.msra.mxu0 0.0
        %1006 = vmatpush.msra.mxu0 0.0
        %1007 = vmatpush.msra.mxu0 0.0
        %1008 = vmatpush.msra.mxu0 0.0
        %1009 = vmatpush.msra.mxu0 0.0
        %1010 = vmatpush.msra.mxu0 0.0
        %1011 = vmatpush.msra.mxu0 0.0
        %1012 = vmatpush.msra.mxu0 0.0
        %1013 = vmatpush.msra.mxu0 0.0
        %1014 = vmatpush.msra.mxu0 %v990
        %1015 = vmatpush.msra.mxu0 %v989
        %1016 = vmatmul.f32.gmra.mxu0 %v992
        %v1017 = vpop.f32.mrf.mxu0
        %v1018 = vadd.f32 0.0, %v1017
        %1019 = vmatmul.f32.gmra.mxu0 %v995
        %v1020 = vpop.f32.mrf.mxu0
        %v1021 = vadd.f32 0.0, %v1020
        %1022 = vmatmul.f32.gmra.mxu0 %v998
        %v1023 = vpop.f32.mrf.mxu0
        %v1024 = vadd.f32 0.0, %v1023
        %1025 = vdwg.mxu0
        %v1026 = vadd.f32 %v725, %v1018
        %v1027 = vadd.f32 %v728, %v1021
        %v1028 = vadd.f32 %v731, %v1024
        %v1029 = vld [vmem:[%s743 + $0x2] sm:$0x1]
        %v1030 = vperm.slane %v1029, 0
        %v1031 = vadd.f32 %v1026, %v1030
        %v1032 = vadd.f32 %v1027, %v1030
        %v1033 = vadd.f32 %v1028, %v1030
        %s1034 = scalar_lea.vmem %s2, 304
        %v1035 = vld [vmem:[%s1034] sm:$0xff]
        %v1036 = vld [vmem:[%s1034 + $0x8] sm:$0xff]
        %v1037 = vld [vmem:[%s1034 + $0x10] sm:$0xff]
        %v1038 = vld [vmem:[%s1034 + $0x18] sm:$0xff]
        %v1039 = vld [vmem:[%s1034 + $0x20] sm:$0xff]
        %v1040 = vld [vmem:[%s1034 + $0x28] sm:$0xff]
        %v1041 = vld [vmem:[%s1034 + $0x30] sm:$0xff]
        %v1042 = vld [vmem:[%s1034 + $0x38] sm:$0xff]
        %v1043 = vld [vmem:[%s1034 + $0x40] sm:$0xff]
        %s1044 = scalar_lea.vmem %s3, 8
        %v1045 = vld [vmem:[%s1044] sm:$0x1]
        %v1046 = vperm.slane %v1045, 0
        %1047 = vmatpush.msra.mxu0 0.0
        %1048 = vmatpush.msra.mxu0 0.0
        %1049 = vmatpush.msra.mxu0 0.0
        %1050 = vmatpush.msra.mxu0 0.0
        %1051 = vmatpush.msra.mxu0 0.0
        %1052 = vmatpush.msra.mxu0 0.0
        %1053 = vmatpush.msra.mxu0 0.0
        %1054 = vmatpush.msra.mxu0 %v1043
        %1055 = vmatpush.msra.mxu0 %v1042
        %1056 = vmatpush.msra.mxu0 %v1041
        %1057 = vmatpush.msra.mxu0 %v1040
        %1058 = vmatpush.msra.mxu0 %v1039
        %1059 = vmatpush.msra.mxu0 %v1038
        %1060 = vmatpush.msra.mxu0 %v1037
        %1061 = vmatpush.msra.mxu0 %v1036
        %1062 = vmatpush.msra.mxu0 %v1035
        %1063 = vmatmul.f32.gmra.mxu0 %v454
        %v1064 = vpop.f32.mrf.mxu0
        %v1065 = vadd.f32 %v1046, %v1064
        %1066 = vmatmul.f32.gmra.mxu0 %v457
        %v1067 = vpop.f32.mrf.mxu0
        %v1068 = vadd.f32 %v1046, %v1067
        %1069 = vmatmul.f32.gmra.mxu0 %v460
        %v1070 = vpop.f32.mrf.mxu0
        %v1071 = vadd.f32 %v1046, %v1070
        %1072 = vdwg.mxu0
        %v1073 = vrot.slane %v986, 5
        %v1074 = vrot.slane %v987, 5
        %v1075 = vrot.slane %v988, 5
        %v1076 = vsel %vm286, %v1074, %v1075
        %v1077 = vsel %vm286, %v1073, %v1074
        %v1078 = vsel %vm286, %v1075, %v1073
        %v1079 = vsel %vm293, %v1078, 0.0
        %v1080 = vsel %vm294, %v1077, 0.0
        %v1081 = vsel %vm295, %v1076, 0.0
        %v1082 = vrot.slane %v986, 6
        %v1083 = vrot.slane %v987, 6
        %v1084 = vrot.slane %v988, 6
        %v1085 = vsel %vm305, %v1083, %v1084
        %v1086 = vsel %vm305, %v1082, %v1083
        %v1087 = vsel %vm305, %v1084, %v1082
        %v1088 = vsel %vm312, %v1087, 0.0
        %v1089 = vsel %vm313, %v1086, 0.0
        %v1090 = vsel %vm314, %v1085, 0.0
        %v1091 = vrot.slane %v986, 7
        %v1092 = vrot.slane %v987, 7
        %v1093 = vrot.slane %v988, 7
        %v1094 = vsel %vm324, %v1092, %v1093
        %v1095 = vsel %vm324, %v1091, %v1092
        %v1096 = vsel %vm324, %v1093, %v1091
        %v1097 = vsel %vm331, %v1096, 0.0
        %v1098 = vsel %vm332, %v1095, 0.0
        %v1099 = vsel %vm333, %v1094, 0.0
        %1103 = vrot.lane.b32.xlu0 %v1088, 16
        %v1104 = vpop.permute.xlu0 %1103
        %1105 = vrot.lane.b32.xlu0 %v1089, 16
        %v1106 = vpop.permute.xlu0 %1105
        %1107 = vrot.lane.b32.xlu0 %v1090, 16
        %v1108 = vpop.permute.xlu0 %1107
        %1115 = vrot.lane.b32.xlu0 %v1097, 32
        %v1116 = vpop.permute.xlu0 %1115
        %1117 = vrot.lane.b32.xlu0 %v1098, 32
        %v1118 = vpop.permute.xlu0 %1117
        %1119 = vrot.lane.b32.xlu0 %v1099, 32
        %v1120 = vpop.permute.xlu0 %1119
        %1124 = vrot.lane.b32.xlu0 %v986, 48
        %v1125 = vpop.permute.xlu0 %1124
        %1126 = vrot.lane.b32.xlu0 %v987, 48
        %v1127 = vpop.permute.xlu0 %1126
        %1128 = vrot.lane.b32.xlu0 %v988, 48
        %v1129 = vpop.permute.xlu0 %1128
        %v1133 = vsel %vm551, %v1079, %v1104
        %v1134 = vsel %vm551, %v1080, %v1106
        %v1135 = vsel %vm551, %v1081, %v1108
        %v1136 = vsel %vm373, %v1133, %v1116
        %v1137 = vsel %vm373, %v1134, %v1118
        %v1138 = vsel %vm373, %v1135, %v1120
        %v1139 = vsel %vm558, %v1136, %v1125
        %v1140 = vsel %vm558, %v1137, %v1127
        %v1141 = vsel %vm558, %v1138, %v1129
        %v1142 = vld [vmem:[%s1034 + $0x48] sm:$0xff]
        %v1143 = vld [vmem:[%s1034 + $0x50] sm:$0xff]
        %v1144 = vld [vmem:[%s1034 + $0x58] sm:$0xff]
        %v1145 = vld [vmem:[%s1034 + $0x60] sm:$0xff]
        %v1146 = vld [vmem:[%s1034 + $0x68] sm:$0xff]
        %v1147 = vld [vmem:[%s1034 + $0x70] sm:$0xff]
        %v1148 = vld [vmem:[%s1034 + $0x78] sm:$0xff]
        %v1149 = vld [vmem:[%s1034 + $0x80] sm:$0xff]
        %v1150 = vld [vmem:[%s1044 + $0x1] sm:$0x1]
        %v1151 = vperm.slane %v1150, 0
        %v1153 = vsel %vm377, %v1139, 0
        %v1156 = vsel %vm377, %v1140, 0
        %v1159 = vsel %vm377, %v1141, 0
        %1161 = vmatpush.msra.mxu0 0.0
        %1162 = vmatpush.msra.mxu0 0.0
        %1163 = vmatpush.msra.mxu0 0.0
        %1164 = vmatpush.msra.mxu0 0.0
        %1165 = vmatpush.msra.mxu0 0.0
        %1166 = vmatpush.msra.mxu0 0.0
        %1167 = vmatpush.msra.mxu0 0.0
        %1168 = vmatpush.msra.mxu0 0.0
        %1169 = vmatpush.msra.mxu0 %v1149
        %1170 = vmatpush.msra.mxu0 %v1148
        %1171 = vmatpush.msra.mxu0 %v1147
        %1172 = vmatpush.msra.mxu0 %v1146
        %1173 = vmatpush.msra.mxu0 %v1145
        %1174 = vmatpush.msra.mxu0 %v1144
        %1175 = vmatpush.msra.mxu0 %v1143
        %1176 = vmatpush.msra.mxu0 %v1142
        %1177 = vmatmul.f32.gmra.mxu0 %v1153
        %v1178 = vpop.f32.mrf.mxu0
        %v1179 = vadd.f32 %v1151, %v1178
        %1180 = vmatmul.f32.gmra.mxu0 %v1156
        %v1181 = vpop.f32.mrf.mxu0
        %v1182 = vadd.f32 %v1151, %v1181
        %1183 = vmatmul.f32.gmra.mxu0 %v1159
        %v1184 = vpop.f32.mrf.mxu0
        %v1185 = vadd.f32 %v1151, %v1184
        %1186 = vdwg.mxu0
        %v1187 = vmul.f32 %v1065, %v1179
        %v1188 = vmul.f32 %v1068, %v1182
        %v1189 = vmul.f32 %v1071, %v1185
        %v1190 = vxor.u32 %v1187, 2147483648
        %v1191 = vxor.u32 %v1188, 2147483648
        %v1192 = vxor.u32 %v1189, 2147483648
        %v1193 = vmul.f32 %v1190, 1.442695
        %v1194 = vpow.pop %v1193
        %v1195 = vmul.f32 %v1191, 1.442695
        %v1196 = vpow.pop %v1195
        %v1197 = vmul.f32 %v1192, 1.442695
        %v1198 = vpow.pop %v1197
        %v1199 = vadd.f32 %v1194, 1.0
        %v1200 = vadd.f32 %v1196, 1.0
        %v1201 = vadd.f32 %v1198, 1.0
        %v1202 = vrcp.pop %v1199
        %v1203 = vmul.f32 %v1199, %v1202
        %v1204 = vsub.f32 1.0, %v1203
        %v1205 = vmul.f32 %v1202, %v1204
        %v1206 = vadd.f32 %v1202, %v1205
        %vm1207 = vweird.f32 %v1199
        %vm1208 = vweird.f32 %v1202
        %vm1209 = vmor %vm1207, %vm1208
        %v1210 = vsel %vm1209, %v1202, %v1206
        %v1211 = vand.u32 2147483647, %v1199
        %vm1212 = vcmp.eq.f32.partialorder %v1211, 8.507059e+37
        %v1213 = vand.u32 %v1199, 2147483648
        %v1214 = vor.u32 1.1754944e-38, %v1213
        %v1215 = vsel %vm1212, %v1214, %v1210
        %v1216 = vmul.f32 1.0, %v1215
        %v1217 = vrcp.pop %v1200
        %v1218 = vmul.f32 %v1200, %v1217
        %v1219 = vsub.f32 1.0, %v1218
        %v1220 = vmul.f32 %v1217, %v1219
        %v1221 = vadd.f32 %v1217, %v1220
        %vm1222 = vweird.f32 %v1200
        %vm1223 = vweird.f32 %v1217
        %vm1224 = vmor %vm1222, %vm1223
        %v1225 = vsel %vm1224, %v1217, %v1221
        %v1226 = vand.u32 2147483647, %v1200
        %vm1227 = vcmp.eq.f32.partialorder %v1226, 8.507059e+37
        %v1228 = vand.u32 %v1200, 2147483648
        %v1229 = vor.u32 1.1754944e-38, %v1228
        %v1230 = vsel %vm1227, %v1229, %v1225
        %v1231 = vmul.f32 1.0, %v1230
        %v1232 = vrcp.pop %v1201
        %v1233 = vmul.f32 %v1201, %v1232
        %v1234 = vsub.f32 1.0, %v1233
        %v1235 = vmul.f32 %v1232, %v1234
        %v1236 = vadd.f32 %v1232, %v1235
        %vm1237 = vweird.f32 %v1201
        %vm1238 = vweird.f32 %v1232
        %vm1239 = vmor %vm1237, %vm1238
        %v1240 = vsel %vm1239, %v1232, %v1236
        %v1241 = vand.u32 2147483647, %v1201
        %vm1242 = vcmp.eq.f32.partialorder %v1241, 8.507059e+37
        %v1243 = vand.u32 %v1201, 2147483648
        %v1244 = vor.u32 1.1754944e-38, %v1243
        %v1245 = vsel %vm1242, %v1244, %v1240
        %v1246 = vmul.f32 1.0, %v1245
        %v1247 = vsub.f32 1.0, %v1216
        %v1248 = vsub.f32 1.0, %v1231
        %v1249 = vsub.f32 1.0, %v1246
        %v1250 = vtanh.pop %v1187
        %v1251 = vtanh.pop %v1188
        %v1252 = vtanh.pop %v1189
        %1256 = vrot.lane.b32.xlu0 %v1250, 112
        %v1257 = vpop.permute.xlu0 %1256
        %1258 = vrot.lane.b32.xlu0 %v1251, 112
        %v1259 = vpop.permute.xlu0 %1258
        %1260 = vrot.lane.b32.xlu0 %v1252, 112
        %v1261 = vpop.permute.xlu0 %1260
        %v1265 = vmul.f32 %v1247, %v1257
        %v1266 = vmul.f32 %v1248, %v1259
        %v1267 = vmul.f32 %v1249, %v1261
        %v1268 = vmul.f32 %v1216, %v986
        %v1269 = vmul.f32 %v1231, %v987
        %v1270 = vmul.f32 %v1246, %v988
        %v1271 = vadd.f32 %v1265, %v1268
        %v1272 = vadd.f32 %v1266, %v1269
        %v1273 = vadd.f32 %v1267, %v1270
        %v1274 = vld [vmem:[%s1034 + $0x88] sm:$0xff]
        %v1275 = vld [vmem:[%s1034 + $0x90] sm:$0xff]
        %v1277 = vsel %vm551, %v1271, 0
        %v1280 = vsel %vm551, %v1272, 0
        %v1283 = vsel %vm551, %v1273, 0
        %1285 = vmatpush.msra.mxu0 0.0
        %1286 = vmatpush.msra.mxu0 0.0
        %1287 = vmatpush.msra.mxu0 0.0
        %1288 = vmatpush.msra.mxu0 0.0
        %1289 = vmatpush.msra.mxu0 0.0
        %1290 = vmatpush.msra.mxu0 0.0
        %1291 = vmatpush.msra.mxu0 0.0
        %1292 = vmatpush.msra.mxu0 0.0
        %1293 = vmatpush.msra.mxu0 0.0
        %1294 = vmatpush.msra.mxu0 0.0
        %1295 = vmatpush.msra.mxu0 0.0
        %1296 = vmatpush.msra.mxu0 0.0
        %1297 = vmatpush.msra.mxu0 0.0
        %1298 = vmatpush.msra.mxu0 0.0
        %1299 = vmatpush.msra.mxu0 %v1275
        %1300 = vmatpush.msra.mxu0 %v1274
        %1301 = vmatmul.f32.gmra.mxu0 %v1277
        %v1302 = vpop.f32.mrf.mxu0
        %v1303 = vadd.f32 0.0, %v1302
        %1304 = vmatmul.f32.gmra.mxu0 %v1280
        %v1305 = vpop.f32.mrf.mxu0
        %v1306 = vadd.f32 0.0, %v1305
        %1307 = vmatmul.f32.gmra.mxu0 %v1283
        %v1308 = vpop.f32.mrf.mxu0
        %v1309 = vadd.f32 0.0, %v1308
        %1310 = vdwg.mxu0
        %v1311 = vadd.f32 %v1031, %v1303
        %v1312 = vadd.f32 %v1032, %v1306
        %v1313 = vadd.f32 %v1033, %v1309
        %v1314 = vld [vmem:[%s1044 + $0x2] sm:$0x1]
        %v1315 = vperm.slane %v1314, 0
        %v1316 = vadd.f32 %v1311, %v1315
        %v1317 = vadd.f32 %v1312, %v1315
        %v1318 = vadd.f32 %v1313, %v1315
        %s1319 = scalar_lea.vmem %s2, 456
        %v1320 = vld [vmem:[%s1319] sm:$0xff]
        %v1321 = vld [vmem:[%s1319 + $0x8] sm:$0xff]
        %v1322 = vld [vmem:[%s1319 + $0x10] sm:$0xff]
        %v1323 = vld [vmem:[%s1319 + $0x18] sm:$0xff]
        %v1324 = vld [vmem:[%s1319 + $0x20] sm:$0xff]
        %v1325 = vld [vmem:[%s1319 + $0x28] sm:$0xff]
        %v1326 = vld [vmem:[%s1319 + $0x30] sm:$0xff]
        %v1327 = vld [vmem:[%s1319 + $0x38] sm:$0xff]
        %v1328 = vld [vmem:[%s1319 + $0x40] sm:$0xff]
        %s1329 = scalar_lea.vmem %s3, 12
        %v1330 = vld [vmem:[%s1329] sm:$0x1]
        %v1331 = vperm.slane %v1330, 0
        %1332 = vmatpush.msra.mxu0 0.0
        %1333 = vmatpush.msra.mxu0 0.0
        %1334 = vmatpush.msra.mxu0 0.0
        %1335 = vmatpush.msra.mxu0 0.0
        %1336 = vmatpush.msra.mxu0 0.0
        %1337 = vmatpush.msra.mxu0 0.0
        %1338 = vmatpush.msra.mxu0 0.0
        %1339 = vmatpush.msra.mxu0 %v1328
        %1340 = vmatpush.msra.mxu0 %v1327
        %1341 = vmatpush.msra.mxu0 %v1326
        %1342 = vmatpush.msra.mxu0 %v1325
        %1343 = vmatpush.msra.mxu0 %v1324
        %1344 = vmatpush.msra.mxu0 %v1323
        %1345 = vmatpush.msra.mxu0 %v1322
        %1346 = vmatpush.msra.mxu0 %v1321
        %1347 = vmatpush.msra.mxu0 %v1320
        %1348 = vmatmul.f32.gmra.mxu0 %v454
        %v1349 = vpop.f32.mrf.mxu0
        %v1350 = vadd.f32 %v1331, %v1349
        %1351 = vmatmul.f32.gmra.mxu0 %v457
        %v1352 = vpop.f32.mrf.mxu0
        %v1353 = vadd.f32 %v1331, %v1352
        %1354 = vmatmul.f32.gmra.mxu0 %v460
        %v1355 = vpop.f32.mrf.mxu0
        %v1356 = vadd.f32 %v1331, %v1355
        %1357 = vdwg.mxu0
        %v1358 = vrot.slane %v1271, 4
        %v1359 = vrot.slane %v1272, 4
        %v1360 = vrot.slane %v1273, 4
        %v1361 = vsel %vm778, %v1359, %v1360
        %v1362 = vsel %vm778, %v1358, %v1359
        %v1363 = vsel %vm778, %v1360, %v1358
        %v1364 = vsel %vm785, %v1361, 0.0
        %v1365 = vsel %vm786, %v1363, 0.0
        %v1366 = vsel %vm787, %v1362, 0.0
        %v1367 = vsel %vm797, %v1273, 0.0
        %v1368 = vsel %vm798, %v1271, 0.0
        %v1369 = vsel %vm799, %v1272, 0.0
        %v1370 = vsel %vm809, %v1363, 0.0
        %v1371 = vsel %vm810, %v1362, 0.0
        %v1372 = vsel %vm811, %v1361, 0.0
        %1376 = vrot.lane.b32.xlu0 %v1367, 16
        %v1377 = vpop.permute.xlu0 %1376
        %1378 = vrot.lane.b32.xlu0 %v1368, 16
        %v1379 = vpop.permute.xlu0 %1378
        %1380 = vrot.lane.b32.xlu0 %v1369, 16
        %v1381 = vpop.permute.xlu0 %1380
        %1388 = vrot.lane.b32.xlu0 %v1370, 32
        %v1389 = vpop.permute.xlu0 %1388
        %1390 = vrot.lane.b32.xlu0 %v1371, 32
        %v1391 = vpop.permute.xlu0 %1390
        %1392 = vrot.lane.b32.xlu0 %v1372, 32
        %v1393 = vpop.permute.xlu0 %1392
        %1397 = vrot.lane.b32.xlu0 %v1271, 48
        %v1398 = vpop.permute.xlu0 %1397
        %1399 = vrot.lane.b32.xlu0 %v1272, 48
        %v1400 = vpop.permute.xlu0 %1399
        %1401 = vrot.lane.b32.xlu0 %v1273, 48
        %v1402 = vpop.permute.xlu0 %1401
        %v1406 = vsel %vm551, %v1364, %v1377
        %v1407 = vsel %vm551, %v1365, %v1379
        %v1408 = vsel %vm551, %v1366, %v1381
        %v1409 = vsel %vm373, %v1406, %v1389
        %v1410 = vsel %vm373, %v1407, %v1391
        %v1411 = vsel %vm373, %v1408, %v1393
        %v1412 = vsel %vm558, %v1409, %v1398
        %v1413 = vsel %vm558, %v1410, %v1400
        %v1414 = vsel %vm558, %v1411, %v1402
        %v1415 = vld [vmem:[%s1319 + $0x48] sm:$0xff]
        %v1416 = vld [vmem:[%s1319 + $0x50] sm:$0xff]
        %v1417 = vld [vmem:[%s1319 + $0x58] sm:$0xff]
        %v1418 = vld [vmem:[%s1319 + $0x60] sm:$0xff]
        %v1419 = vld [vmem:[%s1319 + $0x68] sm:$0xff]
        %v1420 = vld [vmem:[%s1319 + $0x70] sm:$0xff]
        %v1421 = vld [vmem:[%s1319 + $0x78] sm:$0xff]
        %v1422 = vld [vmem:[%s1319 + $0x80] sm:$0xff]
        %v1423 = vld [vmem:[%s1329 + $0x1] sm:$0x1]
        %v1424 = vperm.slane %v1423, 0
        %v1426 = vsel %vm377, %v1412, 0
        %v1429 = vsel %vm377, %v1413, 0
        %v1432 = vsel %vm377, %v1414, 0
        %1434 = vmatpush.msra.mxu0 0.0
        %1435 = vmatpush.msra.mxu0 0.0
        %1436 = vmatpush.msra.mxu0 0.0
        %1437 = vmatpush.msra.mxu0 0.0
        %1438 = vmatpush.msra.mxu0 0.0
        %1439 = vmatpush.msra.mxu0 0.0
        %1440 = vmatpush.msra.mxu0 0.0
        %1441 = vmatpush.msra.mxu0 0.0
        %1442 = vmatpush.msra.mxu0 %v1422
        %1443 = vmatpush.msra.mxu0 %v1421
        %1444 = vmatpush.msra.mxu0 %v1420
        %1445 = vmatpush.msra.mxu0 %v1419
        %1446 = vmatpush.msra.mxu0 %v1418
        %1447 = vmatpush.msra.mxu0 %v1417
        %1448 = vmatpush.msra.mxu0 %v1416
        %1449 = vmatpush.msra.mxu0 %v1415
        %1450 = vmatmul.f32.gmra.mxu0 %v1426
        %v1451 = vpop.f32.mrf.mxu0
        %v1452 = vadd.f32 %v1424, %v1451
        %1453 = vmatmul.f32.gmra.mxu0 %v1429
        %v1454 = vpop.f32.mrf.mxu0
        %v1455 = vadd.f32 %v1424, %v1454
        %1456 = vmatmul.f32.gmra.mxu0 %v1432
        %v1457 = vpop.f32.mrf.mxu0
        %v1458 = vadd.f32 %v1424, %v1457
        %1459 = vdwg.mxu0
        %v1460 = vmul.f32 %v1350, %v1452
        %v1461 = vmul.f32 %v1353, %v1455
        %v1462 = vmul.f32 %v1356, %v1458
        %v1463 = vxor.u32 %v1460, 2147483648
        %v1464 = vxor.u32 %v1461, 2147483648
        %v1465 = vxor.u32 %v1462, 2147483648
        %v1466 = vmul.f32 %v1463, 1.442695
        %v1467 = vpow.pop %v1466
        %v1468 = vmul.f32 %v1464, 1.442695
        %v1469 = vpow.pop %v1468
        %v1470 = vmul.f32 %v1465, 1.442695
        %v1471 = vpow.pop %v1470
        %v1472 = vadd.f32 %v1467, 1.0
        %v1473 = vadd.f32 %v1469, 1.0
        %v1474 = vadd.f32 %v1471, 1.0
        %v1475 = vrcp.pop %v1472
        %v1476 = vmul.f32 %v1472, %v1475
        %v1477 = vsub.f32 1.0, %v1476
        %v1478 = vmul.f32 %v1475, %v1477
        %v1479 = vadd.f32 %v1475, %v1478
        %vm1480 = vweird.f32 %v1472
        %vm1481 = vweird.f32 %v1475
        %vm1482 = vmor %vm1480, %vm1481
        %v1483 = vsel %vm1482, %v1475, %v1479
        %v1484 = vand.u32 2147483647, %v1472
        %vm1485 = vcmp.eq.f32.partialorder %v1484, 8.507059e+37
        %v1486 = vand.u32 %v1472, 2147483648
        %v1487 = vor.u32 1.1754944e-38, %v1486
        %v1488 = vsel %vm1485, %v1487, %v1483
        %v1489 = vmul.f32 1.0, %v1488
        %v1490 = vrcp.pop %v1473
        %v1491 = vmul.f32 %v1473, %v1490
        %v1492 = vsub.f32 1.0, %v1491
        %v1493 = vmul.f32 %v1490, %v1492
        %v1494 = vadd.f32 %v1490, %v1493
        %vm1495 = vweird.f32 %v1473
        %vm1496 = vweird.f32 %v1490
        %vm1497 = vmor %vm1495, %vm1496
        %v1498 = vsel %vm1497, %v1490, %v1494
        %v1499 = vand.u32 2147483647, %v1473
        %vm1500 = vcmp.eq.f32.partialorder %v1499, 8.507059e+37
        %v1501 = vand.u32 %v1473, 2147483648
        %v1502 = vor.u32 1.1754944e-38, %v1501
        %v1503 = vsel %vm1500, %v1502, %v1498
        %v1504 = vmul.f32 1.0, %v1503
        %v1505 = vrcp.pop %v1474
        %v1506 = vmul.f32 %v1474, %v1505
        %v1507 = vsub.f32 1.0, %v1506
        %v1508 = vmul.f32 %v1505, %v1507
        %v1509 = vadd.f32 %v1505, %v1508
        %vm1510 = vweird.f32 %v1474
        %vm1511 = vweird.f32 %v1505
        %vm1512 = vmor %vm1510, %vm1511
        %v1513 = vsel %vm1512, %v1505, %v1509
        %v1514 = vand.u32 2147483647, %v1474
        %vm1515 = vcmp.eq.f32.partialorder %v1514, 8.507059e+37
        %v1516 = vand.u32 %v1474, 2147483648
        %v1517 = vor.u32 1.1754944e-38, %v1516
        %v1518 = vsel %vm1515, %v1517, %v1513
        %v1519 = vmul.f32 1.0, %v1518
        %v1520 = vsub.f32 1.0, %v1489
        %v1521 = vsub.f32 1.0, %v1504
        %v1522 = vsub.f32 1.0, %v1519
        %v1523 = vtanh.pop %v1460
        %v1524 = vtanh.pop %v1461
        %v1525 = vtanh.pop %v1462
        %1529 = vrot.lane.b32.xlu0 %v1523, 112
        %v1530 = vpop.permute.xlu0 %1529
        %1531 = vrot.lane.b32.xlu0 %v1524, 112
        %v1532 = vpop.permute.xlu0 %1531
        %1533 = vrot.lane.b32.xlu0 %v1525, 112
        %v1534 = vpop.permute.xlu0 %1533
        %v1538 = vmul.f32 %v1520, %v1530
        %v1539 = vmul.f32 %v1521, %v1532
        %v1540 = vmul.f32 %v1522, %v1534
        %v1541 = vmul.f32 %v1489, %v1271
        %v1542 = vmul.f32 %v1504, %v1272
        %v1543 = vmul.f32 %v1519, %v1273
        %v1544 = vadd.f32 %v1538, %v1541
        %v1545 = vadd.f32 %v1539, %v1542
        %v1546 = vadd.f32 %v1540, %v1543
        %v1547 = vld [vmem:[%s1319 + $0x88] sm:$0xff]
        %v1548 = vld [vmem:[%s1319 + $0x90] sm:$0xff]
        %v1550 = vsel %vm551, %v1544, 0
        %v1553 = vsel %vm551, %v1545, 0
        %v1556 = vsel %vm551, %v1546, 0
        %1558 = vmatpush.msra.mxu0 0.0
        %1559 = vmatpush.msra.mxu0 0.0
        %1560 = vmatpush.msra.mxu0 0.0
        %1561 = vmatpush.msra.mxu0 0.0
        %1562 = vmatpush.msra.mxu0 0.0
        %1563 = vmatpush.msra.mxu0 0.0
        %1564 = vmatpush.msra.mxu0 0.0
        %1565 = vmatpush.msra.mxu0 0.0
        %1566 = vmatpush.msra.mxu0 0.0
        %1567 = vmatpush.msra.mxu0 0.0
        %1568 = vmatpush.msra.mxu0 0.0
        %1569 = vmatpush.msra.mxu0 0.0
        %1570 = vmatpush.msra.mxu0 0.0
        %1571 = vmatpush.msra.mxu0 0.0
        %1572 = vmatpush.msra.mxu0 %v1548
        %1573 = vmatpush.msra.mxu0 %v1547
        %1574 = vmatmul.f32.gmra.mxu0 %v1550
        %v1575 = vpop.f32.mrf.mxu0
        %v1576 = vadd.f32 0.0, %v1575
        %1577 = vmatmul.f32.gmra.mxu0 %v1553
        %v1578 = vpop.f32.mrf.mxu0
        %v1579 = vadd.f32 0.0, %v1578
        %1580 = vmatmul.f32.gmra.mxu0 %v1556
        %v1581 = vpop.f32.mrf.mxu0
        %v1582 = vadd.f32 0.0, %v1581
        %1583 = vdwg.mxu0
        %v1584 = vadd.f32 %v1316, %v1576
        %v1585 = vadd.f32 %v1317, %v1579
        %v1586 = vadd.f32 %v1318, %v1582
        %v1587 = vld [vmem:[%s1329 + $0x2] sm:$0x1]
        %v1588 = vperm.slane %v1587, 0
        %v1589 = vadd.f32 %v1584, %v1588
        %v1590 = vadd.f32 %v1585, %v1588
        %v1591 = vadd.f32 %v1586, %v1588
        %v1592 = vmax.f32 %v1589, 0.0
        %v1593 = vmax.f32 %v1590, 0.0
        %v1594 = vmax.f32 %v1591, 0.0
        %v1595 = vld [vmem:[%s4 + $0x80] sm:$0xff]
        %v1596 = vld [vmem:[%s4 + $0x88] sm:$0xff]
        %v1597 = vld [vmem:[%s4 + $0x90] sm:$0xff]
        %v1598 = vld [vmem:[%s4 + $0x98] sm:$0xff]
        %v1599 = vld [vmem:[%s5 + $0x1] sm:$0x1]
        %v1600 = vperm.slane %v1599, 0
        %v1602 = vsel %vm373, %v1592, 0
        %v1605 = vsel %vm373, %v1593, 0
        %v1608 = vsel %vm373, %v1594, 0
        %1610 = vmatpush.msra.mxu0 0.0
        %1611 = vmatpush.msra.mxu0 0.0
        %1612 = vmatpush.msra.mxu0 0.0
        %1613 = vmatpush.msra.mxu0 0.0
        %1614 = vmatpush.msra.mxu0 0.0
        %1615 = vmatpush.msra.mxu0 0.0
        %1616 = vmatpush.msra.mxu0 0.0
        %1617 = vmatpush.msra.mxu0 0.0
        %1618 = vmatpush.msra.mxu0 0.0
        %1619 = vmatpush.msra.mxu0 0.0
        %1620 = vmatpush.msra.mxu0 0.0
        %1621 = vmatpush.msra.mxu0 0.0
        %1622 = vmatpush.msra.mxu0 %v1598
        %1623 = vmatpush.msra.mxu0 %v1597
        %1624 = vmatpush.msra.mxu0 %v1596
        %1625 = vmatpush.msra.mxu0 %v1595
        %1626 = vmatmul.f32.gmra.mxu0 %v1602
        %v1627 = vpop.f32.mrf.mxu0
        %v1628 = vadd.f32 %v1600, %v1627
        %1629 = vmatmul.f32.gmra.mxu0 %v1605
        %v1630 = vpop.f32.mrf.mxu0
        %v1631 = vadd.f32 %v1600, %v1630
        %1632 = vmatmul.f32.gmra.mxu0 %v1608
        %v1633 = vpop.f32.mrf.mxu0
        %v1634 = vadd.f32 %v1600, %v1633
        %1635 = vdwg.mxu0
        %v1636 = vmax.f32 %v1628, 0.0
        %v1637 = vmax.f32 %v1631, 0.0
        %v1638 = vmax.f32 %v1634, 0.0
        %v1639 = vld [vmem:[%s4 + $0xa0] sm:$0xff]
        %v1640 = vld [vmem:[%s4 + $0xa8] sm:$0xff]
        %v1641 = vld [vmem:[%s4 + $0xb0] sm:$0xff]
        %v1642 = vld [vmem:[%s4 + $0xb8] sm:$0xff]
        %v1643 = vld [vmem:[%s5 + $0x2] sm:$0x1]
        %v1644 = vperm.slane %v1643, 0
        %v1646 = vsel %vm373, %v1636, 0
        %v1649 = vsel %vm373, %v1637, 0
        %v1652 = vsel %vm373, %v1638, 0
        %1654 = vmatpush.msra.mxu0 0.0
        %1655 = vmatpush.msra.mxu0 0.0
        %1656 = vmatpush.msra.mxu0 0.0
        %1657 = vmatpush.msra.mxu0 0.0
        %1658 = vmatpush.msra.mxu0 0.0
        %1659 = vmatpush.msra.mxu0 0.0
        %1660 = vmatpush.msra.mxu0 0.0
        %1661 = vmatpush.msra.mxu0 0.0
        %1662 = vmatpush.msra.mxu0 0.0
        %1663 = vmatpush.msra.mxu0 0.0
        %1664 = vmatpush.msra.mxu0 0.0
        %1665 = vmatpush.msra.mxu0 0.0
        %1666 = vmatpush.msra.mxu0 %v1642
        %1667 = vmatpush.msra.mxu0 %v1641
        %1668 = vmatpush.msra.mxu0 %v1640
        %1669 = vmatpush.msra.mxu0 %v1639
        %1670 = vmatmul.f32.gmra.mxu0 %v1646
        %v1671 = vpop.f32.mrf.mxu0
        %v1672 = vadd.f32 %v1644, %v1671
        %1673 = vmatmul.f32.gmra.mxu0 %v1649
        %v1674 = vpop.f32.mrf.mxu0
        %v1675 = vadd.f32 %v1644, %v1674
        %1676 = vmatmul.f32.gmra.mxu0 %v1652
        %v1677 = vpop.f32.mrf.mxu0
        %v1678 = vadd.f32 %v1644, %v1677
        %1679 = vdwg.mxu0
        %1680 = vst.msk [vmem:[%s259] sm:$0xff] %vm373, %v1672
        %1681 = vst.msk [vmem:[%s259 + $0x8] sm:$0xff] %vm373, %v1675
        %1682 = vst.msk [vmem:[%s259 + $0x10] sm:$0xff] %vm373, %v1678
        %s1683 = sand.u32 %s164, 1
        %s1684 = scalar_lea.sflag [#allocation3], %s1683
        %s1685 = sand.u32 %s164, 1
        %s1686 = smul.addr %s1685, 24
        %s1687 = scalar_lea.vmem [#allocation2], %s1686
        // Predicated region
        $region45: #{tpu_custom_call.1} parent=43 // pred_check
          %p1688 = pneg %p174
        $region46: #{tpu_custom_call.1} parent=43 // pred_check_branch
          %1690 = sbr.rel (%p1688) target = $region48
        $region47: #{tpu_custom_call.1} parent=43 // pred_region
          %1692 = vsyncadd %s1684, 0
          %s1693 = smul.addr %s20, 3
          %s1694 = smul.addr %s1693, 8
          %s1695 = scalar_lea.hbm %s6, %s1694
          %s1696 = sshll.u32 %s1687, 4
          %s1697 = int_to_ptr.vmem [resolvable:$true] %s1696
          %s1698 = sshll.u32 %s1695, 4
          %s1699 = int_to_ptr.hbm [resolvable:$true] %s1698
          %1704 = dma.vmem_to_hbm [thread:$0]  %s1697, 384, %s1699, %s1684, 128, 128, 8
        $region48: #{tpu_custom_call.1} parent=43 // pred_fallthru
          _
      $region44: #{tpu_custom_call.1} parent=5 // pred_fallthru
        _
      %p1705 = scmp.le.s32.totalorder 2, %s15
      // Predicated region
      $region49: #{tpu_custom_call.1} parent=5 // pred_check
        %p1706 = pneg %p1705
      $region50: #{tpu_custom_call.1} parent=5 // pred_check_branch
        %1708 = sbr.rel (%p1706) target = $region52
      $region51: #{tpu_custom_call.1} parent=5 // pred_region
        %s1709 = ssub.s32 %s15, 2
        // Predicated region
        $region53: #{tpu_custom_call.1} parent=51 // pred_check
          %p1710 = pneg %p180
        $region54: #{tpu_custom_call.1} parent=51 // pred_check_branch
          %1712 = sbr.rel (%p1710) target = $region56
        $region55: #{tpu_custom_call.1} parent=51 // pred_region
          %s1713 = sand.u32 %s165, 1
          %s1714 = scalar_lea.sflag [#allocation3], %s1713
          %s1715 = sand.u32 %s165, 1
          %s1716 = smul.addr %s1715, 24
          %s1717 = scalar_lea.vmem [#allocation2], %s1716
          %1719 = dma.done %s1714, 384
        $region56: #{tpu_custom_call.1} parent=51 // pred_fallthru
          _
      $region52: #{tpu_custom_call.1} parent=5 // pred_fallthru
        _
    $region6: #{tpu_custom_call.1} parent=1 // loop_footer
      %s19 = sadd.s32 1, %s15
    $region7: #{tpu_custom_call.1} parent=1 // loop_footer_branch
      %14 = sbr.rel target = $region3
    $region8: #{tpu_custom_call.1} parent=1 // loop_exit
      _
    %1720 = vsyncpa [#allocation3], 1
    %s1721 = scalar_lea.sflag [#allocation3], 1
    %1722 = vsyncpa %s1721, 1

</llo_original>
